<compile_context>
chip_gen: v7x
topology: tpu7x:2x2x1
jax: 0.10.0
libtpu: 0.0.40
codegen_flags: <defaults>
</compile_context>

<pallas_src>
import functools

import jax
import jax.numpy as jnp
from jax.experimental import pallas as pl
from jax.experimental.pallas import tpu as pltpu

BN_EPS = 1e-5
LANE = 128
F_PAD = LANE        # padded GCN feature width
L_PAD = LANE        # padded LSTM hidden width per gate
OUT_PAD = LANE      # padded head output width
G_PAD = 8           # graph axis padded to the 8-sublane width


# --------------------------------- kernels ---------------------------------- #

def gcn_matmul_kernel(a_ref, h_ref, w_ref, z_ref, stats_ref, acc_ref):
    """Z = A_hat @ (H @ W) over a (row_tile, k_tile) grid + one-pass BN sums.

    a_ref   [TM, TK]      bf16  streamed adjacency block
    h_ref   [TK, F_PAD]   bf16  node features of the contraction row block
    w_ref   [F_PAD,F_PAD] bf16  resident layer weight
    z_ref   [TM, F_PAD]   f32   output row tile (written at last k)
    stats_ref [8, F_PAD]  f32   row 0 = sum(z), row 1 = sum(z*z) for this tile
    acc_ref [TM, F_PAD]   f32   VMEM accumulator
    """
    k = pl.program_id(1)

    @pl.when(k == 0)
    def _():
        acc_ref[...] = jnp.zeros_like(acc_ref)

    # XW for this contraction block (recomputed per row tile; F_PAD/TM extra
    # MXU work relative to the A @ XW product, negligible for TM >= 128).
    xw = jnp.dot(h_ref[...], w_ref[...], preferred_element_type=jnp.float32)
    acc_ref[...] += jnp.dot(a_ref[...], xw.astype(jnp.bfloat16),
                            preferred_element_type=jnp.float32)

    @pl.when(k == pl.num_programs(1) - 1)
    def _():
        z = acc_ref[...]
        z_ref[...] = z
        # One-pass BN statistics: sum and sum-of-squares per 128-lane column.
        s1 = jnp.sum(z, axis=0, keepdims=True)          # [1, F_PAD]
        s2 = jnp.sum(z * z, axis=0, keepdims=True)      # [1, F_PAD]
        rows = jax.lax.broadcasted_iota(jnp.int32, (8, F_PAD), 0)
        stats_ref[...] = jnp.where(rows == 0, s1, jnp.where(rows == 1, s2, 0.0))


def bn_relu_kernel(z_ref, scale_ref, shift_ref, h_ref):
    """h = relu(z * scale + shift), written directly in bf16 (next-layer H)."""
    h_ref[...] = jnp.maximum(
        z_ref[...] * scale_ref[...] + shift_ref[...], 0.0).astype(h_ref.dtype)


def tail_kernel(pool_ref, h_ref, wih_ref, bg_ref, wout_ref, bout_ref,
                o_ref, pooled_acc):
    """global_mean_pool (accumulated over node tiles) + 1-step LSTM + Linear."""
    k = pl.program_id(0)

    @pl.when(k == 0)
    def _():
        pooled_acc[...] = jnp.zeros_like(pooled_acc)

    pooled_acc[...] += jnp.dot(pool_ref[...], h_ref[...],
                               preferred_element_type=jnp.float32)

    @pl.when(k == pl.num_programs(0) - 1)
    def _():
        pooled = pooled_acc[...].astype(jnp.bfloat16)          # [G_PAD, F_PAD]
        # Single LSTM step with h0 = c0 = 0:
        #   gates = pooled @ W_ih^T + (b_ih + b_hh); forget gate dropped (c0==0)
        gates = jnp.dot(pooled, wih_ref[...],
                        preferred_element_type=jnp.float32) + bg_ref[...]
        i_g = jax.nn.sigmoid(gates[:, 0 * L_PAD:1 * L_PAD])   # lane-aligned slices
        g_g = jnp.tanh(gates[:, 1 * L_PAD:2 * L_PAD])
        o_g = jax.nn.sigmoid(gates[:, 2 * L_PAD:3 * L_PAD])
        h1 = o_g * jnp.tanh(i_g * g_g)                         # padded cols stay 0
        o_ref[...] = jnp.dot(h1.astype(jnp.bfloat16), wout_ref[...],
                             preferred_element_type=jnp.float32) + bout_ref[...]


# ------------------------------ pallas_call glue ----------------------------- #

def _vmem_limit_bytes():
    """~80% of physical VMEM: ~102 MiB on v5e/v6e, ~51 MiB on v7x."""
    try:
        cap = int(pltpu.get_tpu_info().vmem_capacity_bytes)
    except Exception:
        cap = 64 * 1024 * 1024
    return cap * 4 // 5


def _pick_tile(n, cap=512):
    """Row/contraction tile for the streamed A_hat operand.

    Capped at 512 so multi-buffered (tile, tile) bf16 A blocks plus the
    [tile, 128] f32 accumulator fit v7x's 64 MiB VMEM; v5e/v6e get headroom.
    """
    if n <= cap:
        return n
    for t in range(cap, 127, -128):
        if n % t == 0:
            return t
    return n  # TODO(synk): pad N up to a multiple of 128 instead of falling back.


def _make_gcn_layer_call(n, tile, vmem_limit):
    nt = n // tile
    a_kwargs = dict(pipeline_mode=pl.Buffered(3)) if nt >= 3 else {}
    return pl.pallas_call(
        gcn_matmul_kernel,
        grid=(nt, nt),
        in_specs=[
            pl.BlockSpec((tile, tile), lambda i, k: (i, k), **a_kwargs),
            pl.BlockSpec((tile, F_PAD), lambda i, k: (k, 0)),
            pl.BlockSpec((F_PAD, F_PAD), lambda i, k: (0, 0)),
        ],
        out_specs=(
            pl.BlockSpec((tile, F_PAD), lambda i, k: (i, 0)),
            pl.BlockSpec((8, F_PAD), lambda i, k: (i, 0)),
        ),
        out_shape=(
            jax.ShapeDtypeStruct((n, F_PAD), jnp.float32),
            jax.ShapeDtypeStruct((nt * 8, F_PAD), jnp.float32),
        ),
        scratch_shapes=[pltpu.VMEM((tile, F_PAD), jnp.float32)],
        compiler_params=pltpu.CompilerParams(
            dimension_semantics=("parallel", "arbitrary"),
            vmem_limit_bytes=vmem_limit,
        ),
    )


def _make_bn_relu_call(n, tile, vmem_limit):
    nt = n // tile
    return pl.pallas_call(
        bn_relu_kernel,
        grid=(nt,),
        in_specs=[
            pl.BlockSpec((tile, F_PAD), lambda i: (i, 0)),
            pl.BlockSpec((1, F_PAD), lambda i: (0, 0)),
            pl.BlockSpec((1, F_PAD), lambda i: (0, 0)),
        ],
        out_specs=pl.BlockSpec((tile, F_PAD), lambda i: (i, 0)),
        out_shape=jax.ShapeDtypeStruct((n, F_PAD), jnp.bfloat16),
        compiler_params=pltpu.CompilerParams(
            dimension_semantics=("parallel",),
            vmem_limit_bytes=vmem_limit,
        ),
    )


def _make_tail_call(n, tile, vmem_limit):
    nt = n // tile
    return pl.pallas_call(
        tail_kernel,
        grid=(nt,),
        in_specs=[
            pl.BlockSpec((G_PAD, tile), lambda k: (0, k)),
            pl.BlockSpec((tile, F_PAD), lambda k: (k, 0)),
            pl.BlockSpec((F_PAD, 3 * L_PAD), lambda k: (0, 0)),
            pl.BlockSpec((1, 3 * L_PAD), lambda k: (0, 0)),
            pl.BlockSpec((L_PAD, OUT_PAD), lambda k: (0, 0)),
            pl.BlockSpec((1, OUT_PAD), lambda k: (0, 0)),
        ],
        out_specs=pl.BlockSpec((G_PAD, OUT_PAD), lambda k: (0, 0)),
        out_shape=jax.ShapeDtypeStruct((G_PAD, OUT_PAD), jnp.float32),
        scratch_shapes=[pltpu.VMEM((G_PAD, F_PAD), jnp.float32)],
        compiler_params=pltpu.CompilerParams(
            dimension_semantics=("arbitrary",),
            vmem_limit_bytes=vmem_limit,
        ),
    )


@functools.partial(jax.jit, static_argnames=("num_layers", "output_dim", "tile"))
def temporal_gcn_forward(params, a_hat, pool, x, num_layers, output_dim, tile=None):
    n, in_channels = x.shape
    num_graphs = pool.shape[0]
    assert num_graphs <= G_PAD and in_channels <= F_PAD and output_dim <= OUT_PAD
    if tile is None:
        tile = _pick_tile(n)
    assert n % tile == 0, "node count must be a multiple of the tile size"
    nt = n // tile
    vmem_limit = _vmem_limit_bytes()

    # Lane-dense padded, bf16 MXU operands.
    x_pad = jnp.zeros((n, F_PAD), jnp.float32).at[:, :in_channels].set(x)
    h = x_pad.astype(jnp.bfloat16)                       # h carried in bf16
    a = a_hat.astype(jnp.bfloat16)
    pool_pad = jnp.zeros((G_PAD, n), jnp.float32).at[:num_graphs, :].set(pool)
    pool_pad = pool_pad.astype(jnp.bfloat16)

    gcn_call = _make_gcn_layer_call(n, tile, vmem_limit)
    bn_call = _make_bn_relu_call(n, tile, vmem_limit)
    tail_call = _make_tail_call(n, tile, vmem_limit)

    for l in range(num_layers):
        z, stats = gcn_call(a, h, params["w_stack"][l])
        # Reduce the per-row-tile partial sums (tiny) and fold BN into one FMA.
        stats = stats.reshape(nt, 8, F_PAD)
        s1 = stats[:, 0, :].sum(axis=0)
        s2 = stats[:, 1, :].sum(axis=0)
        mean = s1 / n
        var = jnp.maximum(s2 / n - mean * mean, 0.0)     # E[z^2]-E[z]^2, f32 + guard
        scale = params["gamma"][l] * jax.lax.rsqrt(var + BN_EPS)
        shift = params["beta"][l] - mean * scale
        h = bn_call(z, scale.reshape(1, F_PAD), shift.reshape(1, F_PAD))

    out_pad = tail_call(pool_pad, h, params["w_ih"], params["b_gates"],
                        params["w_out"], params["b_out"])
    return out_pad[:num_graphs, :output_dim]


# ------------------------------- plain-JAX glue ------------------------------ #

def build_norm_adj(edge_index, num_nodes):
    """Dense GCN-normalized adjacency D^{-1/2} (A + I) D^{-1/2}."""
    A = jnp.zeros((num_nodes, num_nodes), jnp.float32)
    # GCNConv aggregates messages from source (row 0) into target (row 1).
    A = A.at[edge_index[1], edge_index[0]].add(1.0)
    diag = jnp.diag(A)
    A = A + jnp.diag(jnp.where(diag > 0, 0.0, 1.0))      # add_remaining_self_loops
    deg = A.sum(axis=1)
    d_inv_sqrt = jax.lax.rsqrt(jnp.maximum(deg, 1e-12))
    return d_inv_sqrt[:, None] * A * d_inv_sqrt[None, :]


def build_pool_matrix(batch, num_graphs):
    """[num_graphs, num_nodes]: row g averages the nodes assigned to graph g."""
    onehot = (batch[None, :] == jnp.arange(num_graphs)[:, None]).astype(jnp.float32)
    counts = jnp.maximum(onehot.sum(axis=1, keepdims=True), 1.0)
    return onehot / counts


def init_params(key, in_channels, hidden_dim, num_layers, lstm_hidden, output_dim):
    """Returns (padded kernel params, unpadded reference params)."""
    assert max(in_channels, hidden_dim) <= F_PAD
    assert lstm_hidden <= L_PAD and output_dim <= OUT_PAD

    def rnd(a):  # reference uses the same bf16-rounded operands as the kernel
        return a.astype(jnp.bfloat16).astype(jnp.float32)

    dims = [in_channels] + [hidden_dim] * num_layers
    w_stack = jnp.zeros((num_layers, F_PAD, F_PAD), jnp.float32)
    gamma = jnp.zeros((num_layers, F_PAD), jnp.float32)
    beta = jnp.zeros((num_layers, F_PAD), jnp.float32)
    w_real = []
    for l in range(num_layers):
        key, kw = jax.random.split(key)
        w = 0.1 * jax.random.normal(kw, (dims[l], dims[l + 1]), jnp.float32)
        w_stack = w_stack.at[l, :dims[l], :dims[l + 1]].set(w)
        gamma = gamma.at[l, :dims[l + 1]].set(1.0)
        w_real.append(rnd(w))
        # beta (and the cancelled GCNConv bias) stay zero.

    key, k_ih, k_b, k_out = jax.random.split(key, 4)
    # torch LSTM weight_ih_l0 is [4*H, in] with gate order (i, f, g, o); stored
    # transposed.  The forget-gate block is dropped in the kernel (c0 == 0).
    w_ih_full = 0.1 * jax.random.normal(k_ih, (hidden_dim, 4 * lstm_hidden), jnp.float32)
    b_g_full = 0.1 * jax.random.normal(k_b, (4 * lstm_hidden,), jnp.float32)  # b_ih + b_hh
    w_out_real = 0.1 * jax.random.normal(k_out, (lstm_hidden, output_dim), jnp.float32)

    gate_sel = (0, 2, 3)  # keep i, g, o; each in its own 128-lane slot
    w_ih = jnp.zeros((F_PAD, 3 * L_PAD), jnp.float32)
    b_gates = jnp.zeros((1, 3 * L_PAD), jnp.float32)
    for slot, g in enumerate(gate_sel):
        w_ih = w_ih.at[:hidden_dim, slot * L_PAD:slot * L_PAD + lstm_hidden].set(
            w_ih_full[:, g * lstm_hidden:(g + 1) * lstm_hidden])
        b_gates = b_gates.at[0, slot * L_PAD:slot * L_PAD + lstm_hidden].set(
            b_g_full[g * lstm_hidden:(g + 1) * lstm_hidden])

    w_out = jnp.zeros((L_PAD, OUT_PAD), jnp.float32)
    w_out = w_out.at[:lstm_hidden, :output_dim].set(w_out_real)
    b_out = jnp.zeros((1, OUT_PAD), jnp.float32)

    kernel_params = dict(
        w_stack=w_stack.astype(jnp.bfloat16),
        gamma=gamma, beta=beta,
        w_ih=w_ih.astype(jnp.bfloat16), b_gates=b_gates,
        w_out=w_out.astype(jnp.bfloat16), b_out=b_out,
    )
    ref_params = dict(w=w_real, w_ih=rnd(w_ih_full), b_gates=b_g_full,
                      w_out=rnd(w_out_real))
    return kernel_params, ref_params


def reference_forward(ref_params, a_hat, x, pool, lstm_hidden):
    """Pure-JAX f32 reference (same math, unpadded, full 4-gate LSTM)."""
    h = x
    for w in ref_params["w"]:
        z = a_hat @ (h @ w)
        mean = z.mean(axis=0, keepdims=True)
        var = ((z - mean) ** 2).mean(axis=0, keepdims=True)
        h = jnp.maximum((z - mean) * jax.lax.rsqrt(var + BN_EPS), 0.0)
    pooled = pool @ h
    gates = pooled @ ref_params["w_ih"] + ref_params["b_gates"][None, :]
    L = lstm_hidden
    i_g = jax.nn.sigmoid(gates[:, 0 * L:1 * L])
    f_g = jax.nn.sigmoid(gates[:, 1 * L:2 * L])        # multiplies c0 == 0
    g_g = jnp.tanh(gates[:, 2 * L:3 * L])
    o_g = jax.nn.sigmoid(gates[:, 3 * L:4 * L])
    c1 = f_g * 0.0 + i_g * g_g
    h1 = o_g * jnp.tanh(c1)
    return h1 @ ref_params["w_out"]


# ----------------------------------- main ------------------------------------ #

if __name__ == "__main__":
    in_channels, hidden_dim, num_layers = 4, 32, 2
    lstm_hidden, output_dim = 32, 8
    num_nodes, num_graphs, num_edges = 256, 2, 1024
    tile = 128   # -> (2, 2) GCN grid: exercises the tiled row/contraction pipeline

    root = jax.random.PRNGKey(0)
    k_param, k_x, k_src, k_dst = jax.random.split(root, 4)

    params, ref_params = init_params(k_param, in_channels, hidden_dim, num_layers,
                                     lstm_hidden, output_dim)

    x = jax.random.normal(k_x, (num_nodes, in_channels), jnp.float32)
    src = jax.random.randint(k_src, (num_edges,), 0, num_nodes)
    dst = jax.random.randint(k_dst, (num_edges,), 0, num_nodes)
    edge_index = jnp.stack([jnp.concatenate([src, dst]),      # undirected edges
                            jnp.concatenate([dst, src])])
    batch = jnp.concatenate([jnp.zeros(num_nodes // 2, jnp.int32),
                             jnp.ones(num_nodes - num_nodes // 2, jnp.int32)])

    a_hat = build_norm_adj(edge_index, num_nodes)
    pool = build_pool_matrix(batch, num_graphs)

    out = temporal_gcn_forward(params, a_hat, pool, x, num_layers, output_dim,
                               tile=tile)
    out = jax.block_until_ready(out)
    assert out.shape == (num_graphs, output_dim)
    assert bool(jnp.all(jnp.isfinite(out)))

    # Cross-check against a pure-JAX f32 reference that consumes the same
    # bf16-rounded operands the kernel sees (isolates tiling/fusion effects).
    def rnd(a):
        return a.astype(jnp.bfloat16).astype(jnp.float32)
    ref = reference_forward(ref_params, rnd(a_hat), rnd(x), rnd(pool), lstm_hidden)
    assert jnp.allclose(out, ref, atol=5e-2, rtol=5e-2), \
        f"max abs diff {float(jnp.max(jnp.abs(out - ref)))}"

    print("KERNEL_OK")
</pallas_src>

<mosaic_0001>
module attributes {stable_mosaic.version = 11 : i64} {
  func.func @gcn_matmul_kernel(%arg0: i32, %arg1: i32, %arg2: memref<128x128xbf16, #tpu.memory_space<vmem>>, %arg3: memref<128x128xbf16, #tpu.memory_space<vmem>>, %arg4: memref<128x128xbf16, #tpu.memory_space<vmem>>, %arg5: memref<128x128xf32, #tpu.memory_space<vmem>>, %arg6: memref<8x128xf32, #tpu.memory_space<vmem>>, %arg7: memref<128x128xf32, #tpu.memory_space<vmem>>) attributes {dimension_semantics = [#tpu.dimension_semantics<parallel>, #tpu.dimension_semantics<arbitrary>], iteration_bounds = array<i64: 2, 2>, scalar_prefetch = 0 : i64, scratch_operands = 1 : i64, tpu.core_type = #tpu.core_type<tc>, window_params = [{transform_indices = @transform_0, window_bounds = array<i64: 128, 128>}, {transform_indices = @transform_1, window_bounds = array<i64: 128, 128>}, {pipeline_mode = #tpu.pipeline_mode<synchronous>, transform_indices = @transform_2, window_bounds = array<i64: 128, 128>}, {transform_indices = @transform_3, window_bounds = array<i64: 128, 128>}, {transform_indices = @transform_4, window_bounds = array<i64: 8, 128>}]} {
    %c0_i32 = arith.constant 0 : i32
    %0 = arith.cmpi eq, %arg1, %c0_i32 : i32
    %1 = arith.extui %0 : i1 to i32
    %c0_i32_0 = arith.constant 0 : i32
    %2 = arith.cmpi ne, %1, %c0_i32_0 : i32
    scf.if %2 {
      %cst_12 = arith.constant 0.000000e+00 : f32
      %15 = vector.broadcast %cst_12 : f32 to vector<128x128xf32>
      %c0_13 = arith.constant 0 : index
      %c0_14 = arith.constant 0 : index
      %16 = vector.load %arg7[%c0_13, %c0_14] : memref<128x128xf32, #tpu.memory_space<vmem>>, vector<128x128xf32>
      tpu.vector_store %arg7[%c0_13, %c0_14], %15 {strides = array<i32>} : memref<128x128xf32, #tpu.memory_space<vmem>>, vector<128x128xf32>,
    } else {
    }
    %c0 = arith.constant 0 : index
    %c0_1 = arith.constant 0 : index
    %3 = vector.load %arg3[%c0, %c0_1] : memref<128x128xbf16, #tpu.memory_space<vmem>>, vector<128x128xbf16>
    %c0_2 = arith.constant 0 : index
    %c0_3 = arith.constant 0 : index
    %4 = vector.load %arg4[%c0_2, %c0_3] : memref<128x128xbf16, #tpu.memory_space<vmem>>, vector<128x128xbf16>
    %cst = arith.constant dense<0.000000e+00> : vector<128x128xf32>
    %5 = tpu.matmul %3, %4, %cst {dimension_numbers = #tpu.dot_dimension_numbers<[1], [0], [0], [1], [0, 0, 1, 1], [], []>} : vector<128x128xbf16>, vector<128x128xbf16>, vector<128x128xf32> -> vector<128x128xf32>
    %c0_4 = arith.constant 0 : index
    %c0_5 = arith.constant 0 : index
    %6 = vector.load %arg7[%c0_4, %c0_5] : memref<128x128xf32, #tpu.memory_space<vmem>>, vector<128x128xf32>
    %c0_6 = arith.constant 0 : index
    %c0_7 = arith.constant 0 : index
    %7 = vector.load %arg2[%c0_6, %c0_7] : memref<128x128xbf16, #tpu.memory_space<vmem>>, vector<128x128xbf16>
    %8 = arith.truncf %5 : vector<128x128xf32> to vector<128x128xbf16>
    %cst_8 = arith.constant dense<0.000000e+00> : vector<128x128xf32>
    %9 = tpu.matmul %7, %8, %cst_8 {dimension_numbers = #tpu.dot_dimension_numbers<[1], [0], [0], [1], [0, 0, 1, 1], [], []>} : vector<128x128xbf16>, vector<128x128xbf16>, vector<128x128xf32> -> vector<128x128xf32>
    %10 = arith.addf %6, %9 : vector<128x128xf32>
    %c0_9 = arith.constant 0 : index
    %c0_10 = arith.constant 0 : index
    %11 = vector.load %arg7[%c0_9, %c0_10] : memref<128x128xf32, #tpu.memory_space<vmem>>, vector<128x128xf32>
    tpu.vector_store %arg7[%c0_9, %c0_10], %10 {strides = array<i32>} : memref<128x128xf32, #tpu.memory_space<vmem>>, vector<128x128xf32>,
    %c1_i32 = arith.constant 1 : i32
    %12 = arith.cmpi eq, %arg1, %c1_i32 : i32
    %13 = arith.extui %12 : i1 to i32
    %c0_i32_11 = arith.constant 0 : i32
    %14 = arith.cmpi ne, %13, %c0_i32_11 : i32
    scf.if %14 {
      %c0_12 = arith.constant 0 : index
      %c0_13 = arith.constant 0 : index
      %15 = vector.load %arg7[%c0_12, %c0_13] : memref<128x128xf32, #tpu.memory_space<vmem>>, vector<128x128xf32>
      %c0_14 = arith.constant 0 : index
      %c0_15 = arith.constant 0 : index
      %16 = vector.load %arg5[%c0_14, %c0_15] : memref<128x128xf32, #tpu.memory_space<vmem>>, vector<128x128xf32>
      tpu.vector_store %arg5[%c0_14, %c0_15], %15 {strides = array<i32>} : memref<128x128xf32, #tpu.memory_space<vmem>>, vector<128x128xf32>,
      %cst_16 = arith.constant dense<0.000000e+00> : vector<128xf32>
      %17 = vector.multi_reduction <add>, %15, %cst_16 [0] : vector<128x128xf32> to vector<128xf32>
      %18 = vector.shape_cast %17 : vector<128xf32> to vector<1x128xf32>
      %19 = arith.mulf %15, %15 : vector<128x128xf32>
      %cst_17 = arith.constant dense<0.000000e+00> : vector<128xf32>
      %20 = vector.multi_reduction <add>, %19, %cst_17 [0] : vector<128x128xf32> to vector<128xf32>
      %21 = vector.shape_cast %20 : vector<128xf32> to vector<1x128xf32>
      %22 = tpu.iota {dimensions = array<i32: 0>} : vector<8x128xi32>
      %c0_i32_18 = arith.constant 0 : i32
      %23 = vector.broadcast %c0_i32_18 : i32 to vector<8x128xi32>
      %24 = arith.cmpi eq, %22, %23 : vector<8x128xi32>
      %c1_i32_19 = arith.constant 1 : i32
      %25 = vector.broadcast %c1_i32_19 : i32 to vector<8x128xi32>
      %26 = arith.cmpi eq, %22, %25 : vector<8x128xi32>
      %cst_20 = arith.constant 0.000000e+00 : f32
      %27 = vector.shape_cast %21 : vector<1x128xf32> to vector<1x128xf32>
      %28 = vector.broadcast %27 : vector<1x128xf32> to vector<8x128xf32>
      %29 = vector.broadcast %cst_20 : f32 to vector<8x128xf32>
      %30 = arith.select %26, %28, %29 : vector<8x128xi1>, vector<8x128xf32>
      %31 = vector.shape_cast %18 : vector<1x128xf32> to vector<1x128xf32>
      %32 = vector.broadcast %31 : vector<1x128xf32> to vector<8x128xf32>
      %33 = arith.select %24, %32, %30 : vector<8x128xi1>, vector<8x128xf32>
      %c0_21 = arith.constant 0 : index
      %c0_22 = arith.constant 0 : index
      %34 = vector.load %arg6[%c0_21, %c0_22] : memref<8x128xf32, #tpu.memory_space<vmem>>, vector<8x128xf32>
      tpu.vector_store %arg6[%c0_21, %c0_22], %33 {strides = array<i32>} : memref<8x128xf32, #tpu.memory_space<vmem>>, vector<8x128xf32>,
    } else {
    }
    return
  }
  func.func @transform_0(%arg0: i32, %arg1: i32) -> (i32, i32) {
    %c0_i32 = arith.constant 0 : i32
    return %arg0, %arg1 : i32, i32
  }
  func.func @transform_1(%arg0: i32, %arg1: i32) -> (i32, i32) {
    %c0_i32 = arith.constant 0 : i32
    %c0_i32_0 = arith.constant 0 : i32
    return %arg1, %c0_i32 : i32, i32
  }
  func.func @transform_2(%arg0: i32, %arg1: i32) -> (i32, i32) {
    %c0_i32 = arith.constant 0 : i32
    %c0_i32_0 = arith.constant 0 : i32
    %c0_i32_1 = arith.constant 0 : i32
    return %c0_i32, %c0_i32_0 : i32, i32
  }
  func.func @transform_3(%arg0: i32, %arg1: i32) -> (i32, i32) {
    %c0_i32 = arith.constant 0 : i32
    %c0_i32_0 = arith.constant 0 : i32
    return %arg0, %c0_i32 : i32, i32
  }
  func.func @transform_4(%arg0: i32, %arg1: i32) -> (i32, i32) {
    %c0_i32 = arith.constant 0 : i32
    %c0_i32_0 = arith.constant 0 : i32
    return %arg0, %c0_i32 : i32, i32
  }
}

module attributes {stable_mosaic.version = 11 : i64} {
  func.func @bn_relu_kernel(%arg0: i32, %arg1: memref<128x128xf32, #tpu.memory_space<vmem>>, %arg2: memref<1x128xf32, #tpu.memory_space<vmem>>, %arg3: memref<1x128xf32, #tpu.memory_space<vmem>>, %arg4: memref<128x128xbf16, #tpu.memory_space<vmem>>) attributes {dimension_semantics = [#tpu.dimension_semantics<parallel>], iteration_bounds = array<i64: 2>, scalar_prefetch = 0 : i64, scratch_operands = 0 : i64, tpu.core_type = #tpu.core_type<tc>, window_params = [{transform_indices = @transform_0, window_bounds = array<i64: 128, 128>}, {pipeline_mode = #tpu.pipeline_mode<synchronous>, transform_indices = @transform_1, window_bounds = array<i64: 1, 128>}, {pipeline_mode = #tpu.pipeline_mode<synchronous>, transform_indices = @transform_2, window_bounds = array<i64: 1, 128>}, {transform_indices = @transform_3, window_bounds = array<i64: 128, 128>}]} {
    %c0 = arith.constant 0 : index
    %c0_0 = arith.constant 0 : index
    %0 = vector.load %arg1[%c0, %c0_0] : memref<128x128xf32, #tpu.memory_space<vmem>>, vector<128x128xf32>
    %c0_1 = arith.constant 0 : index
    %c0_2 = arith.constant 0 : index
    %1 = vector.load %arg2[%c0_1, %c0_2] : memref<1x128xf32, #tpu.memory_space<vmem>>, vector<1x128xf32>
    %2 = vector.broadcast %1 : vector<1x128xf32> to vector<128x128xf32>
    %3 = arith.mulf %0, %2 : vector<128x128xf32>
    %c0_3 = arith.constant 0 : index
    %c0_4 = arith.constant 0 : index
    %4 = vector.load %arg3[%c0_3, %c0_4] : memref<1x128xf32, #tpu.memory_space<vmem>>, vector<1x128xf32>
    %5 = vector.broadcast %4 : vector<1x128xf32> to vector<128x128xf32>
    %6 = arith.addf %3, %5 : vector<128x128xf32>
    %cst = arith.constant 0.000000e+00 : f32
    %7 = vector.broadcast %cst : f32 to vector<128x128xf32>
    %8 = arith.maximumf %6, %7 : vector<128x128xf32>
    %9 = arith.truncf %8 : vector<128x128xf32> to vector<128x128xbf16>
    %c0_5 = arith.constant 0 : index
    %c0_6 = arith.constant 0 : index
    %10 = vector.load %arg4[%c0_5, %c0_6] : memref<128x128xbf16, #tpu.memory_space<vmem>>, vector<128x128xbf16>
    tpu.vector_store %arg4[%c0_5, %c0_6], %9 {strides = array<i32>} : memref<128x128xbf16, #tpu.memory_space<vmem>>, vector<128x128xbf16>,
    return
  }
  func.func @transform_0(%arg0: i32) -> (i32, i32) {
    %c0_i32 = arith.constant 0 : i32
    %c0_i32_0 = arith.constant 0 : i32
    return %arg0, %c0_i32 : i32, i32
  }
  func.func @transform_1(%arg0: i32) -> (i32, i32) {
    %c0_i32 = arith.constant 0 : i32
    %c0_i32_0 = arith.constant 0 : i32
    %c0_i32_1 = arith.constant 0 : i32
    return %c0_i32, %c0_i32_0 : i32, i32
  }
  func.func @transform_2(%arg0: i32) -> (i32, i32) {
    %c0_i32 = arith.constant 0 : i32
    %c0_i32_0 = arith.constant 0 : i32
    %c0_i32_1 = arith.constant 0 : i32
    return %c0_i32, %c0_i32_0 : i32, i32
  }
  func.func @transform_3(%arg0: i32) -> (i32, i32) {
    %c0_i32 = arith.constant 0 : i32
    %c0_i32_0 = arith.constant 0 : i32
    return %arg0, %c0_i32 : i32, i32
  }
}

module attributes {stable_mosaic.version = 11 : i64} {
  func.func @tail_kernel(%arg0: i32, %arg1: memref<8x128xbf16, #tpu.memory_space<vmem>>, %arg2: memref<128x128xbf16, #tpu.memory_space<vmem>>, %arg3: memref<128x384xbf16, #tpu.memory_space<vmem>>, %arg4: memref<1x384xf32, #tpu.memory_space<vmem>>, %arg5: memref<128x128xbf16, #tpu.memory_space<vmem>>, %arg6: memref<1x128xf32, #tpu.memory_space<vmem>>, %arg7: memref<8x128xf32, #tpu.memory_space<vmem>>, %arg8: memref<8x128xf32, #tpu.memory_space<vmem>>) attributes {dimension_semantics = [#tpu.dimension_semantics<arbitrary>], iteration_bounds = array<i64: 2>, scalar_prefetch = 0 : i64, scratch_operands = 1 : i64, tpu.core_type = #tpu.core_type<tc>, window_params = [{transform_indices = @transform_0, window_bounds = array<i64: 8, 128>}, {transform_indices = @transform_1, window_bounds = array<i64: 128, 128>}, {pipeline_mode = #tpu.pipeline_mode<synchronous>, transform_indices = @transform_2, window_bounds = array<i64: 128, 384>}, {pipeline_mode = #tpu.pipeline_mode<synchronous>, transform_indices = @transform_3, window_bounds = array<i64: 1, 384>}, {pipeline_mode = #tpu.pipeline_mode<synchronous>, transform_indices = @transform_4, window_bounds = array<i64: 128, 128>}, {pipeline_mode = #tpu.pipeline_mode<synchronous>, transform_indices = @transform_5, window_bounds = array<i64: 1, 128>}, {pipeline_mode = #tpu.pipeline_mode<synchronous>, transform_indices = @transform_6, window_bounds = array<i64: 8, 128>}]} {
    %c0_i32 = arith.constant 0 : i32
    %0 = arith.cmpi eq, %arg0, %c0_i32 : i32
    %1 = arith.extui %0 : i1 to i32
    %c0_i32_0 = arith.constant 0 : i32
    %2 = arith.cmpi ne, %1, %c0_i32_0 : i32
    scf.if %2 {
      %cst_9 = arith.constant 0.000000e+00 : f32
      %12 = vector.broadcast %cst_9 : f32 to vector<8x128xf32>
      %c0_10 = arith.constant 0 : index
      %c0_11 = arith.constant 0 : index
      %13 = vector.load %arg8[%c0_10, %c0_11] : memref<8x128xf32, #tpu.memory_space<vmem>>, vector<8x128xf32>
      tpu.vector_store %arg8[%c0_10, %c0_11], %12 {strides = array<i32>} : memref<8x128xf32, #tpu.memory_space<vmem>>, vector<8x128xf32>,
    } else {
    }
    %c0 = arith.constant 0 : index
    %c0_1 = arith.constant 0 : index
    %3 = vector.load %arg8[%c0, %c0_1] : memref<8x128xf32, #tpu.memory_space<vmem>>, vector<8x128xf32>
    %c0_2 = arith.constant 0 : index
    %c0_3 = arith.constant 0 : index
    %4 = vector.load %arg1[%c0_2, %c0_3] : memref<8x128xbf16, #tpu.memory_space<vmem>>, vector<8x128xbf16>
    %c0_4 = arith.constant 0 : index
    %c0_5 = arith.constant 0 : index
    %5 = vector.load %arg2[%c0_4, %c0_5] : memref<128x128xbf16, #tpu.memory_space<vmem>>, vector<128x128xbf16>
    %cst = arith.constant dense<0.000000e+00> : vector<8x128xf32>
    %6 = tpu.matmul %4, %5, %cst {dimension_numbers = #tpu.dot_dimension_numbers<[1], [0], [0], [1], [0, 0, 1, 1], [], []>} : vector<8x128xbf16>, vector<128x128xbf16>, vector<8x128xf32> -> vector<8x128xf32>
    %7 = arith.addf %3, %6 : vector<8x128xf32>
    %c0_6 = arith.constant 0 : index
    %c0_7 = arith.constant 0 : index
    %8 = vector.load %arg8[%c0_6, %c0_7] : memref<8x128xf32, #tpu.memory_space<vmem>>, vector<8x128xf32>
    tpu.vector_store %arg8[%c0_6, %c0_7], %7 {strides = array<i32>} : memref<8x128xf32, #tpu.memory_space<vmem>>, vector<8x128xf32>,
    %c1_i32 = arith.constant 1 : i32
    %9 = arith.cmpi eq, %arg0, %c1_i32 : i32
    %10 = arith.extui %9 : i1 to i32
    %c0_i32_8 = arith.constant 0 : i32
    %11 = arith.cmpi ne, %10, %c0_i32_8 : i32
    scf.if %11 {
      %c0_9 = arith.constant 0 : index
      %c0_10 = arith.constant 0 : index
      %12 = vector.load %arg8[%c0_9, %c0_10] : memref<8x128xf32, #tpu.memory_space<vmem>>, vector<8x128xf32>
      %13 = arith.truncf %12 : vector<8x128xf32> to vector<8x128xbf16>
      %c0_11 = arith.constant 0 : index
      %c0_12 = arith.constant 0 : index
      %14 = vector.load %arg3[%c0_11, %c0_12] : memref<128x384xbf16, #tpu.memory_space<vmem>>, vector<128x384xbf16>
      %cst_13 = arith.constant dense<0.000000e+00> : vector<8x384xf32>
      %15 = tpu.matmul %13, %14, %cst_13 {dimension_numbers = #tpu.dot_dimension_numbers<[1], [0], [0], [1], [0, 0, 1, 1], [], []>} : vector<8x128xbf16>, vector<128x384xbf16>, vector<8x384xf32> -> vector<8x384xf32>
      %c0_14 = arith.constant 0 : index
      %c0_15 = arith.constant 0 : index
      %16 = vector.load %arg4[%c0_14, %c0_15] : memref<1x384xf32, #tpu.memory_space<vmem>>, vector<1x384xf32>
      %17 = vector.broadcast %16 : vector<1x384xf32> to vector<8x384xf32>
      %18 = arith.addf %15, %17 : vector<8x384xf32>
      %19 = vector.extract_strided_slice %18 {offsets = [0, 0], sizes = [8, 128], strides = [1, 1]} : vector<8x384xf32> to vector<8x128xf32>
      %20 = arith.negf %19 : vector<8x128xf32>
      %21 = math.exp %20 : vector<8x128xf32>
      %cst_16 = arith.constant 1.000000e+00 : f32
      %22 = vector.broadcast %cst_16 : f32 to vector<8x128xf32>
      %23 = arith.addf %22, %21 : vector<8x128xf32>
      %24 = arith.divf %22, %23 : vector<8x128xf32>
      %25 = vector.extract_strided_slice %18 {offsets = [0, 128], sizes = [8, 128], strides = [1, 1]} : vector<8x384xf32> to vector<8x128xf32>
      %26 = math.tanh %25 : vector<8x128xf32>
      %27 = vector.extract_strided_slice %18 {offsets = [0, 256], sizes = [8, 128], strides = [1, 1]} : vector<8x384xf32> to vector<8x128xf32>
      %28 = arith.negf %27 : vector<8x128xf32>
      %29 = math.exp %28 : vector<8x128xf32>
      %cst_17 = arith.constant 1.000000e+00 : f32
      %30 = vector.broadcast %cst_17 : f32 to vector<8x128xf32>
      %31 = arith.addf %30, %29 : vector<8x128xf32>
      %32 = arith.divf %30, %31 : vector<8x128xf32>
      %33 = arith.mulf %24, %26 : vector<8x128xf32>
      %34 = math.tanh %33 : vector<8x128xf32>
      %35 = arith.mulf %32, %34 : vector<8x128xf32>
      %36 = arith.truncf %35 : vector<8x128xf32> to vector<8x128xbf16>
      %c0_18 = arith.constant 0 : index
      %c0_19 = arith.constant 0 : index
      %37 = vector.load %arg5[%c0_18, %c0_19] : memref<128x128xbf16, #tpu.memory_space<vmem>>, vector<128x128xbf16>
      %cst_20 = arith.constant dense<0.000000e+00> : vector<8x128xf32>
      %38 = tpu.matmul %36, %37, %cst_20 {dimension_numbers = #tpu.dot_dimension_numbers<[1], [0], [0], [1], [0, 0, 1, 1], [], []>} : vector<8x128xbf16>, vector<128x128xbf16>, vector<8x128xf32> -> vector<8x128xf32>
      %c0_21 = arith.constant 0 : index
      %c0_22 = arith.constant 0 : index
      %39 = vector.load %arg6[%c0_21, %c0_22] : memref<1x128xf32, #tpu.memory_space<vmem>>, vector<1x128xf32>
      %40 = vector.broadcast %39 : vector<1x128xf32> to vector<8x128xf32>
      %41 = arith.addf %38, %40 : vector<8x128xf32>
      %c0_23 = arith.constant 0 : index
      %c0_24 = arith.constant 0 : index
      %42 = vector.load %arg7[%c0_23, %c0_24] : memref<8x128xf32, #tpu.memory_space<vmem>>, vector<8x128xf32>
      tpu.vector_store %arg7[%c0_23, %c0_24], %41 {strides = array<i32>} : memref<8x128xf32, #tpu.memory_space<vmem>>, vector<8x128xf32>,
    } else {
    }
    return
  }
  func.func @transform_0(%arg0: i32) -> (i32, i32) {
    %c0_i32 = arith.constant 0 : i32
    %c0_i32_0 = arith.constant 0 : i32
    return %c0_i32, %arg0 : i32, i32
  }
  func.func @transform_1(%arg0: i32) -> (i32, i32) {
    %c0_i32 = arith.constant 0 : i32
    %c0_i32_0 = arith.constant 0 : i32
    return %arg0, %c0_i32 : i32, i32
  }
  func.func @transform_2(%arg0: i32) -> (i32, i32) {
    %c0_i32 = arith.constant 0 : i32
    %c0_i32_0 = arith.constant 0 : i32
    %c0_i32_1 = arith.constant 0 : i32
    return %c0_i32, %c0_i32_0 : i32, i32
  }
  func.func @transform_3(%arg0: i32) -> (i32, i32) {
    %c0_i32 = arith.constant 0 : i32
    %c0_i32_0 = arith.constant 0 : i32
    %c0_i32_1 = arith.constant 0 : i32
    return %c0_i32, %c0_i32_0 : i32, i32
  }
  func.func @transform_4(%arg0: i32) -> (i32, i32) {
    %c0_i32 = arith.constant 0 : i32
    %c0_i32_0 = arith.constant 0 : i32
    %c0_i32_1 = arith.constant 0 : i32
    return %c0_i32, %c0_i32_0 : i32, i32
  }
  func.func @transform_5(%arg0: i32) -> (i32, i32) {
    %c0_i32 = arith.constant 0 : i32
    %c0_i32_0 = arith.constant 0 : i32
    %c0_i32_1 = arith.constant 0 : i32
    return %c0_i32, %c0_i32_0 : i32, i32
  }
  func.func @transform_6(%arg0: i32) -> (i32, i32) {
    %c0_i32 = arith.constant 0 : i32
    %c0_i32_0 = arith.constant 0 : i32
    %c0_i32_1 = arith.constant 0 : i32
    return %c0_i32, %c0_i32_0 : i32, i32
  }
}

</mosaic_0001>

<llo_original>
// kernel: temporal_gcn_forward.5
$region0: #{temporal_gcn_forward.5}
  #allocation0 [shape = 'u32[]', space=smem, size = 0x4, offset = 0x4, fixed_abs, tag = 'smem constant byte address 0x4 - core index']
  #allocation1 [shape = 'u32[144,128]{1,0:T(1,128)}', space=vmem, size = 0x12000, scoped, tag = 'internal scratch']
  #allocation2 [shape = 'f32[128,128]{1,0:T(8,128)}', space=vmem, size = 0x10000, scoped, tag = 'scratch operand']
  %s0 = inlined_call_operand.vmem [shape: bf16[256,256], index: 0, kind: input, shape index: {}]
  %s1 = inlined_call_operand.vmem [shape: bf16[256,128], index: 1, kind: input, shape index: {}]
  %s2 = inlined_call_operand.vmem [shape: bf16[128,128], index: 2, kind: input, shape index: {}]
  %s3 = inlined_call_operand.vmem [shape: f32[256,128], index: 3, kind: output, shape index: {0}]
  %s4 = inlined_call_operand.vmem [shape: f32[16,128], index: 4, kind: output, shape index: {1}]
  %5 = xla_tuple %s3, %s4
  %s6 = sld [smem:[#allocation0]]
  $region102: #{temporal_gcn_forward.5} parent=0
    _
  %s8 = ssub.s32 1, %s6
  %s9 = scalar_select 0, %s8, %s6
  $region1: #{temporal_gcn_forward.5} parent=0
    #allocation3 [shape = 'u8[65536]{0}', space=vmem, size = 0x10000, scoped, tag = 'input window, operand 0']
    loop: start=0, step=1, limit=6
    $region2: #{temporal_gcn_forward.5} parent=1 // loop_pre_header
      _
    $region3: #{temporal_gcn_forward.5} parent=1 // loop_header
      %s11 = sphi 0, %s15
      %p12 = scmp.ge.s32.totalorder %s11, 6
      %s18 = sphi 0, %s30
      %s19 = sphi 0, %s26
      %s20 = sphi 0, %s18
      %s21 = sphi 0, %s19
      %s22 = sphi 0, %s20
      %s23 = sphi 0, %s21
      %s35 = sphi 0, %s37
      %s38 = sphi 0, %s35
      %s39 = sphi 0, %s38
      %s55 = sphi 0, %s39
      %s61 = sphi 0, %s63
      %s64 = sphi 0, %s61
      %s65 = sphi 0, %s64
      %s81 = sphi 0, %s65
      %s85 = sphi 0, %s85
      %s87 = sphi 0, %s85
      %s88 = sphi 0, %s87
      %s102 = sphi 0, %s88
      %s108 = sphi 0, %s110
      %s111 = sphi 0, %s108
      %s112 = sphi 0, %s111
      %s128 = sphi 0, %s112
      %s134 = sphi 0, %s136
      %s137 = sphi 0, %s134
      %s138 = sphi 0, %s137
      %s154 = sphi 0, %s138
    $region4: #{temporal_gcn_forward.5} parent=1 // loop_header_branch
      %14 = sbr.rel (%p12) target = $region8
    $region5: #{temporal_gcn_forward.5} parent=1 // loop_body
      %s16 = ssub.s32 %s11, 1
      %s17 = ssub.s32 %s11, 2
      %s24 = sadd.s32 1, %s19
      %p25 = scmp.ge.s32.totalorder %s24, 2
      %s26 = scalar_select %p25, 0, %s24
      %s27 = sadd.s32 1, %s18
      %s28 = scalar_select %p25, %s27, %s18
      %p29 = scmp.ge.s32.totalorder %s28, 2
      %s30 = scalar_select %p29, 0, %s28
      %s31 = ssub.s32 %s18, %s30
      %s32 = ssub.s32 %s19, %s26
      %s33 = sor.u32 %s31, %s32
      %p34 = scmp.eq.s32.totalorder %s33, 0
      %s36 = sadd.s32 %s35, 1
      %s37 = scalar_select %p34, %s35, %s36
      %p40 = pneg %p34
      %p41 = scmp.eq.s32.totalorder %s11, 3
      %p42 = por %p40, %p41
      %p43 = scmp.ne.s32.totalorder %s35, %s38
      %p44 = scmp.eq.s32.totalorder %s11, 0
      %p45 = por %p43, %p44
      %p46 = scmp.ne.s32.totalorder %s35, %s38
      %p47 = scmp.eq.s32.totalorder %s16, 3
      %p48 = por %p46, %p47
      %p49 = scmp.ne.s32.totalorder %s38, %s39
      %p50 = scmp.eq.s32.totalorder %s16, 0
      %p51 = por %p49, %p50
      %p52 = scmp.ne.s32.totalorder %s38, %s39
      %p53 = scmp.eq.s32.totalorder %s17, 3
      %p54 = por %p52, %p53
      %p56 = scmp.ne.s32.totalorder %s39, %s55
      %p57 = scmp.eq.s32.totalorder %s17, 0
      %p58 = por %p56, %p57
      %s59 = ssub.s32 %s19, %s26
      %p60 = scmp.eq.s32.totalorder %s59, 0
      %s62 = sadd.s32 %s61, 1
      %s63 = scalar_select %p60, %s61, %s62
      %p66 = pneg %p60
      %p67 = scmp.eq.s32.totalorder %s11, 3
      %p68 = por %p66, %p67
      %p69 = scmp.ne.s32.totalorder %s61, %s64
      %p70 = scmp.eq.s32.totalorder %s11, 0
      %p71 = por %p69, %p70
      %p72 = scmp.ne.s32.totalorder %s61, %s64
      %p73 = scmp.eq.s32.totalorder %s16, 3
      %p74 = por %p72, %p73
      %p75 = scmp.ne.s32.totalorder %s64, %s65
      %p76 = scmp.eq.s32.totalorder %s16, 0
      %p77 = por %p75, %p76
      %p78 = scmp.ne.s32.totalorder %s64, %s65
      %p79 = scmp.eq.s32.totalorder %s17, 3
      %p80 = por %p78, %p79
      %p82 = scmp.ne.s32.totalorder %s65, %s81
      %p83 = scmp.eq.s32.totalorder %s17, 0
      %p84 = por %p82, %p83
      %s86 = sadd.s32 %s85, 1
      %p89 = scmp.eq.s32.totalorder %s11, 3
      %p90 = scmp.ne.s32.totalorder %s85, %s87
      %p91 = scmp.eq.s32.totalorder %s11, 0
      %p92 = por %p90, %p91
      %p93 = scmp.ne.s32.totalorder %s85, %s87
      %p94 = scmp.eq.s32.totalorder %s16, 3
      %p95 = por %p93, %p94
      %p96 = scmp.ne.s32.totalorder %s87, %s88
      %p97 = scmp.eq.s32.totalorder %s16, 0
      %p98 = por %p96, %p97
      %p99 = scmp.ne.s32.totalorder %s87, %s88
      %p100 = scmp.eq.s32.totalorder %s17, 3
      %p101 = por %p99, %p100
      %p103 = scmp.ne.s32.totalorder %s88, %s102
      %p104 = scmp.eq.s32.totalorder %s17, 0
      %p105 = por %p103, %p104
      %s106 = ssub.s32 %s18, %s30
      %p107 = scmp.eq.s32.totalorder %s106, 0
      %s109 = sadd.s32 %s108, 1
      %s110 = scalar_select %p107, %s108, %s109
      %p113 = pneg %p107
      %p114 = scmp.eq.s32.totalorder %s11, 3
      %p115 = por %p113, %p114
      %p116 = scmp.ne.s32.totalorder %s108, %s111
      %p117 = scmp.eq.s32.totalorder %s11, 0
      %p118 = por %p116, %p117
      %p119 = scmp.ne.s32.totalorder %s108, %s111
      %p120 = scmp.eq.s32.totalorder %s16, 3
      %p121 = por %p119, %p120
      %p122 = scmp.ne.s32.totalorder %s111, %s112
      %p123 = scmp.eq.s32.totalorder %s16, 0
      %p124 = por %p122, %p123
      %p125 = scmp.ne.s32.totalorder %s111, %s112
      %p126 = scmp.eq.s32.totalorder %s17, 3
      %p127 = por %p125, %p126
      %p129 = scmp.ne.s32.totalorder %s112, %s128
      %p130 = scmp.eq.s32.totalorder %s17, 0
      %p131 = por %p129, %p130
      %s132 = ssub.s32 %s18, %s30
      %p133 = scmp.eq.s32.totalorder %s132, 0
      %s135 = sadd.s32 %s134, 1
      %s136 = scalar_select %p133, %s134, %s135
      %p139 = pneg %p133
      %p140 = scmp.eq.s32.totalorder %s11, 3
      %p141 = por %p139, %p140
      %p142 = scmp.ne.s32.totalorder %s134, %s137
      %p143 = scmp.eq.s32.totalorder %s11, 0
      %p144 = por %p142, %p143
      %p145 = scmp.ne.s32.totalorder %s134, %s137
      %p146 = scmp.eq.s32.totalorder %s16, 3
      %p147 = por %p145, %p146
      %p148 = scmp.ne.s32.totalorder %s137, %s138
      %p149 = scmp.eq.s32.totalorder %s16, 0
      %p150 = por %p148, %p149
      %p151 = scmp.ne.s32.totalorder %s137, %s138
      %p152 = scmp.eq.s32.totalorder %s17, 3
      %p153 = por %p151, %p152
      %p155 = scmp.ne.s32.totalorder %s138, %s154
      %p156 = scmp.eq.s32.totalorder %s17, 0
      %p157 = por %p155, %p156
      %p158 = scmp.le.s32.totalorder 1, %s11
      %p159 = scmp.lt.s32.totalorder %s11, 5
      %p160 = pnand %p158, %p159
      %p161 = pneg %p160
      // Predicated region
      $region9: #{temporal_gcn_forward.5} parent=5 // pred_check
        _
      $region10: #{temporal_gcn_forward.5} parent=5 // pred_check_branch
        %163 = sbr.rel (%p160) target = $region12
      $region11: #{temporal_gcn_forward.5} parent=5 // pred_region
        %s164 = ssub.s32 %s11, 1
        // Predicated region
        $region13: #{temporal_gcn_forward.5} parent=11 // pred_check
          %p165 = pneg %p98
        $region14: #{temporal_gcn_forward.5} parent=11 // pred_check_branch
          %167 = sbr.rel (%p165) target = $region16
        $region15: #{temporal_gcn_forward.5} parent=11 // pred_region
          _
        $region16: #{temporal_gcn_forward.5} parent=11 // pred_fallthru
          _
      $region12: #{temporal_gcn_forward.5} parent=5 // pred_fallthru
        _
      %p168 = scmp.lt.s32.totalorder %s11, 4
      // Predicated region
      $region17: #{temporal_gcn_forward.5} parent=5 // pred_check
        %p169 = pneg %p168
      $region18: #{temporal_gcn_forward.5} parent=5 // pred_check_branch
        %171 = sbr.rel (%p169) target = $region20
      $region19: #{temporal_gcn_forward.5} parent=5 // pred_region
        // Predicated region
        $region21: #{temporal_gcn_forward.5} parent=19 // pred_check
          %p172 = pneg %p45
        $region22: #{temporal_gcn_forward.5} parent=19 // pred_check_branch
          %174 = sbr.rel (%p172) target = $region24
        $region23: #{temporal_gcn_forward.5} parent=19 // pred_region
          %s175 = sand.u32 %s35, 1
          %s176 = sand.u32 %s35, 1
          %s177 = smul.addr %s176, 64
          %s178 = scalar_lea.vmem [#allocation3], %s177
          %s179 = smul.u32 16, %s18
          %s180 = smul.addr %s179, 2
          %s181 = sadd.s32 %s19, %s180
          %s182 = smul.addr %s181, 4
          %s183 = scalar_lea.vmem %s0, %s182
          // Predicated region
          $region25: #{temporal_gcn_forward.5} parent=23 // pred_check
            _
          $region26: #{temporal_gcn_forward.5} parent=23 // pred_check_branch
            %185 = sbr.rel (0) target = $region28
          $region27: #{temporal_gcn_forward.5} parent=23 // pred_region
            // Predicated region
            $region29: #{temporal_gcn_forward.5} parent=27 // pred_check
              _
            $region30: #{temporal_gcn_forward.5} parent=27 // pred_check_branch
              %187 = sbr.rel target = $region32
            $region31: #{temporal_gcn_forward.5} parent=27 // pred_region
              // Predicated region
              $region44: #{temporal_gcn_forward.5} parent=31 // pred_check
                _
              $region45: #{temporal_gcn_forward.5} parent=31 // pred_check_branch
                %232 = sbr.rel (0) target = $region47
              $region46: #{temporal_gcn_forward.5} parent=31 // pred_region
                loop: start=0, step=1, limit=1
                $region48: #{temporal_gcn_forward.5} parent=46 // loop_pre_header
                  _
                $region49: #{temporal_gcn_forward.5} parent=46 // loop_header
                  %s234 = sphi 0, %s238
                  %p235 = scmp.ge.s32.totalorder %s234, 1
                  %s239 = sphi %s183, %s183
                  %s240 = sphi %s178, %s178
                $region50: #{temporal_gcn_forward.5} parent=46 // loop_header_branch
                  %237 = sbr.rel (%p235) target = $region54
                $region51: #{temporal_gcn_forward.5} parent=46 // loop_body
                  _
                $region52: #{temporal_gcn_forward.5} parent=46 // loop_footer
                  %s238 = sadd.s32 1, %s234
                $region53: #{temporal_gcn_forward.5} parent=46 // loop_footer_branch
                  %233 = sbr.rel target = $region49
                $region54: #{temporal_gcn_forward.5} parent=46 // loop_exit
                  _
                loop: start=0, step=1, limit=1
                $region55: #{temporal_gcn_forward.5} parent=46 // loop_pre_header
                  _
                $region56: #{temporal_gcn_forward.5} parent=46 // loop_header
                  %s243 = sphi 0, %s247
                  %p244 = scmp.ge.s32.totalorder %s243, 1
                  %s248 = sphi %s183, %s183
                  %s249 = sphi %s178, %s178
                $region57: #{temporal_gcn_forward.5} parent=46 // loop_header_branch
                  %246 = sbr.rel (%p244) target = $region61
                $region58: #{temporal_gcn_forward.5} parent=46 // loop_body
                  %v250 = vld [vmem:[%s248] sm:$0xf]
                  %251 = vst [vmem:[%s249] sm:$0xf] %v250
                  %v252 = vld [vmem:[%s248 + $0x8] sm:$0xf]
                  %253 = vst [vmem:[%s249 + $0x4] sm:$0xf] %v252
                  %v254 = vld [vmem:[%s248 + $0x10] sm:$0xf]
                  %255 = vst [vmem:[%s249 + $0x8] sm:$0xf] %v254
                  %v256 = vld [vmem:[%s248 + $0x18] sm:$0xf]
                  %257 = vst [vmem:[%s249 + $0xc] sm:$0xf] %v256
                  %v258 = vld [vmem:[%s248 + $0x20] sm:$0xf]
                  %259 = vst [vmem:[%s249 + $0x10] sm:$0xf] %v258
                  %v260 = vld [vmem:[%s248 + $0x28] sm:$0xf]
                  %261 = vst [vmem:[%s249 + $0x14] sm:$0xf] %v260
                  %v262 = vld [vmem:[%s248 + $0x30] sm:$0xf]
                  %263 = vst [vmem:[%s249 + $0x18] sm:$0xf] %v262
                  %v264 = vld [vmem:[%s248 + $0x38] sm:$0xf]
                  %265 = vst [vmem:[%s249 + $0x1c] sm:$0xf] %v264
                  %v266 = vld [vmem:[%s248 + $0x40] sm:$0xf]
                  %267 = vst [vmem:[%s249 + $0x20] sm:$0xf] %v266
                  %v268 = vld [vmem:[%s248 + $0x48] sm:$0xf]
                  %269 = vst [vmem:[%s249 + $0x24] sm:$0xf] %v268
                  %v270 = vld [vmem:[%s248 + $0x50] sm:$0xf]
                  %271 = vst [vmem:[%s249 + $0x28] sm:$0xf] %v270
                  %v272 = vld [vmem:[%s248 + $0x58] sm:$0xf]
                  %273 = vst [vmem:[%s249 + $0x2c] sm:$0xf] %v272
                  %v274 = vld [vmem:[%s248 + $0x60] sm:$0xf]
                  %275 = vst [vmem:[%s249 + $0x30] sm:$0xf] %v274
                  %v276 = vld [vmem:[%s248 + $0x68] sm:$0xf]
                  %277 = vst [vmem:[%s249 + $0x34] sm:$0xf] %v276
                  %v278 = vld [vmem:[%s248 + $0x70] sm:$0xf]
                  %279 = vst [vmem:[%s249 + $0x38] sm:$0xf] %v278
                  %v280 = vld [vmem:[%s248 + $0x78] sm:$0xf]
                  %281 = vst [vmem:[%s249 + $0x3c] sm:$0xf] %v280
                $region59: #{temporal_gcn_forward.5} parent=46 // loop_footer
                  %s247 = sadd.s32 1, %s243
                $region60: #{temporal_gcn_forward.5} parent=46 // loop_footer_branch
                  %242 = sbr.rel target = $region56
                $region61: #{temporal_gcn_forward.5} parent=46 // loop_exit
                  _
              $region47: #{temporal_gcn_forward.5} parent=31 // pred_fallthru
                _
            $region32: #{temporal_gcn_forward.5} parent=27 // pred_fallthru
              _
            // Predicated region
            $region33: #{temporal_gcn_forward.5} parent=27 // pred_check
              _
            $region34: #{temporal_gcn_forward.5} parent=27 // pred_check_branch
              %189 = sbr.rel (0) target = $region36
            $region35: #{temporal_gcn_forward.5} parent=27 // pred_region
              loop: start=0, step=1, limit=1
              $region37: #{temporal_gcn_forward.5} parent=35 // loop_pre_header
                _
              $region38: #{temporal_gcn_forward.5} parent=35 // loop_header
                %s192 = sphi 0, %s196
                %p193 = scmp.ge.s32.totalorder %s192, 1
                %s197 = sphi %s183, %s183
                %s198 = sphi %s178, %s178
              $region39: #{temporal_gcn_forward.5} parent=35 // loop_header_branch
                %195 = sbr.rel (%p193) target = $region43
              $region40: #{temporal_gcn_forward.5} parent=35 // loop_body
                %v199 = vld [vmem:[%s197] sm:$0xf]
                %200 = vst [vmem:[%s198] sm:$0xf] %v199
                %v201 = vld [vmem:[%s197 + $0x8] sm:$0xf]
                %202 = vst [vmem:[%s198 + $0x4] sm:$0xf] %v201
                %v203 = vld [vmem:[%s197 + $0x10] sm:$0xf]
                %204 = vst [vmem:[%s198 + $0x8] sm:$0xf] %v203
                %v205 = vld [vmem:[%s197 + $0x18] sm:$0xf]
                %206 = vst [vmem:[%s198 + $0xc] sm:$0xf] %v205
                %v207 = vld [vmem:[%s197 + $0x20] sm:$0xf]
                %208 = vst [vmem:[%s198 + $0x10] sm:$0xf] %v207
                %v209 = vld [vmem:[%s197 + $0x28] sm:$0xf]
                %210 = vst [vmem:[%s198 + $0x14] sm:$0xf] %v209
                %v211 = vld [vmem:[%s197 + $0x30] sm:$0xf]
                %212 = vst [vmem:[%s198 + $0x18] sm:$0xf] %v211
                %v213 = vld [vmem:[%s197 + $0x38] sm:$0xf]
                %214 = vst [vmem:[%s198 + $0x1c] sm:$0xf] %v213
                %v215 = vld [vmem:[%s197 + $0x40] sm:$0xf]
                %216 = vst [vmem:[%s198 + $0x20] sm:$0xf] %v215
                %v217 = vld [vmem:[%s197 + $0x48] sm:$0xf]
                %218 = vst [vmem:[%s198 + $0x24] sm:$0xf] %v217
                %v219 = vld [vmem:[%s197 + $0x50] sm:$0xf]
                %220 = vst [vmem:[%s198 + $0x28] sm:$0xf] %v219
                %v221 = vld [vmem:[%s197 + $0x58] sm:$0xf]
                %222 = vst [vmem:[%s198 + $0x2c] sm:$0xf] %v221
                %v223 = vld [vmem:[%s197 + $0x60] sm:$0xf]
                %224 = vst [vmem:[%s198 + $0x30] sm:$0xf] %v223
                %v225 = vld [vmem:[%s197 + $0x68] sm:$0xf]
                %226 = vst [vmem:[%s198 + $0x34] sm:$0xf] %v225
                %v227 = vld [vmem:[%s197 + $0x70] sm:$0xf]
                %228 = vst [vmem:[%s198 + $0x38] sm:$0xf] %v227
                %v229 = vld [vmem:[%s197 + $0x78] sm:$0xf]
                %230 = vst [vmem:[%s198 + $0x3c] sm:$0xf] %v229
              $region41: #{temporal_gcn_forward.5} parent=35 // loop_footer
                %s196 = sadd.s32 1, %s192
              $region42: #{temporal_gcn_forward.5} parent=35 // loop_footer_branch
                %191 = sbr.rel target = $region38
              $region43: #{temporal_gcn_forward.5} parent=35 // loop_exit
                _
            $region36: #{temporal_gcn_forward.5} parent=27 // pred_fallthru
              _
          $region28: #{temporal_gcn_forward.5} parent=23 // pred_fallthru
            _
          %282 = vnop
        $region24: #{temporal_gcn_forward.5} parent=19 // pred_fallthru
          _
        // Predicated region
        $region62: #{temporal_gcn_forward.5} parent=19 // pred_check
          %p283 = pneg %p71
        $region63: #{temporal_gcn_forward.5} parent=19 // pred_check_branch
          %285 = sbr.rel (%p283) target = $region65
        $region64: #{temporal_gcn_forward.5} parent=19 // pred_region
          %s286 = smul.u32 16, %s19
          %p287 = scmp.lt.s32.totalorder %s286, 31
          %s288 = scalar_select %p287, %s286, 31
          %s289 = smul.addr %s288, 4
          %s290 = scalar_lea.vmem %s1, %s289
          %s291 = smul.u32 16, %s19
        $region65: #{temporal_gcn_forward.5} parent=19 // pred_fallthru
          _
      $region20: #{temporal_gcn_forward.5} parent=5 // pred_fallthru
        _
      %p292 = scmp.le.s32.totalorder 1, %s11
      %p293 = scmp.lt.s32.totalorder %s11, 5
      %p294 = pnand %p292, %p293
      %p295 = pneg %p294
      // Predicated region
      $region66: #{temporal_gcn_forward.5} parent=5 // pred_check
        _
      $region67: #{temporal_gcn_forward.5} parent=5 // pred_check_branch
        %297 = sbr.rel (%p294) target = $region69
      $region68: #{temporal_gcn_forward.5} parent=5 // pred_region
        %s298 = ssub.s32 %s11, 1
        %s299 = sand.u32 %s38, 1
        %s300 = sand.u32 %s38, 1
        %s301 = smul.addr %s300, 64
        %s302 = scalar_lea.vmem [#allocation3], %s301
        // Predicated region
        $region70: #{temporal_gcn_forward.5} parent=68 // pred_check
          %p303 = pneg %p51
        $region71: #{temporal_gcn_forward.5} parent=68 // pred_check_branch
          %305 = sbr.rel (%p303) target = $region73
        $region72: #{temporal_gcn_forward.5} parent=68 // pred_region
          _
        $region73: #{temporal_gcn_forward.5} parent=68 // pred_fallthru
          _
        %s306 = sand.u32 %s38, 1
        %s307 = sand.u32 %s38, 1
        %s308 = smul.addr %s307, 64
        %s309 = scalar_lea.vmem [#allocation3], %s308
        %p310 = pneg %p51
        %p311 = pneg %p48
        %s312 = smul.u32 16, %s21
        %p313 = scmp.lt.s32.totalorder %s312, 31
        %s314 = scalar_select %p313, %s312, 31
        %s315 = smul.addr %s314, 4
        %s316 = scalar_lea.vmem %s1, %s315
        %p317 = pneg %p77
        %p318 = pneg %p74
        %p319 = pneg %p98
        %p320 = pneg %p95
        %p321 = pneg %p124
        %p322 = pneg %p121
        %s323 = smul.u32 16, %s20
        %p324 = scmp.lt.s32.totalorder %s323, 31
        %s325 = scalar_select %p324, %s323, 31
        %s326 = smul.addr %s325, 8
        %s327 = scalar_lea.vmem %s3, %s326
        %p328 = pneg %p150
        %p329 = pneg %p147
        %p330 = scmp.lt.s32.totalorder %s20, 1
        %s331 = scalar_select %p330, %s20, 1
        %s332 = smul.addr %s331, 8
        %s333 = scalar_lea.vmem %s4, %s332
        %s334 = smul.u32 16, %s20
        %s335 = smul.u32 16, %s21
        %p336 = scmp.lt.s32.totalorder %s335, 31
        %s337 = scalar_select %p336, %s335, 31
        %s338 = smul.addr %s337, 4
        %s339 = scalar_lea.vmem %s1, %s338
        %s340 = smul.u32 16, %s21
        %s341 = smul.u32 16, %s20
        %p342 = scmp.lt.s32.totalorder %s341, 31
        %s343 = scalar_select %p342, %s341, 31
        %s344 = smul.addr %s343, 8
        %s345 = scalar_lea.vmem %s3, %s344
        %s346 = smul.u32 16, %s20
        %p347 = scmp.lt.s32.totalorder %s20, 1
        %s348 = scalar_select %p347, %s20, 1
        %s349 = smul.addr %s348, 8
        %s350 = scalar_lea.vmem %s4, %s349
        %p352 = scmp.eq.s32.totalorder %s21, 0
        // Predicated region
        $region74: #{temporal_gcn_forward.5} parent=68 // pred_check
          %p353 = pneg %p352
        $region75: #{temporal_gcn_forward.5} parent=68 // pred_check_branch
          %355 = sbr.rel (%p353) target = $region77
        $region76: #{temporal_gcn_forward.5} parent=68 // pred_region
          %356 = vst [vmem:[#allocation2] sm:$0xff] 0.0
          %357 = vst [vmem:[#allocation2 + $0x8] sm:$0xff] 0.0
          %358 = vst [vmem:[#allocation2 + $0x10] sm:$0xff] 0.0
          %359 = vst [vmem:[#allocation2 + $0x18] sm:$0xff] 0.0
          %360 = vst [vmem:[#allocation2 + $0x20] sm:$0xff] 0.0
          %361 = vst [vmem:[#allocation2 + $0x28] sm:$0xff] 0.0
          %362 = vst [vmem:[#allocation2 + $0x30] sm:$0xff] 0.0
          %363 = vst [vmem:[#allocation2 + $0x38] sm:$0xff] 0.0
          %364 = vst [vmem:[#allocation2 + $0x40] sm:$0xff] 0.0
          %365 = vst [vmem:[#allocation2 + $0x48] sm:$0xff] 0.0
          %366 = vst [vmem:[#allocation2 + $0x50] sm:$0xff] 0.0
          %367 = vst [vmem:[#allocation2 + $0x58] sm:$0xff] 0.0
          %368 = vst [vmem:[#allocation2 + $0x60] sm:$0xff] 0.0
          %369 = vst [vmem:[#allocation2 + $0x68] sm:$0xff] 0.0
          %370 = vst [vmem:[#allocation2 + $0x70] sm:$0xff] 0.0
          %371 = vst [vmem:[#allocation2 + $0x78] sm:$0xff] 0.0
        $region77: #{temporal_gcn_forward.5} parent=68 // pred_fallthru
          _
        %v372 = vld [vmem:[%s339] sm:$0xf]
        %v373 = vld [vmem:[%s339 + $0x4] sm:$0xf]
        %v374 = vld [vmem:[%s339 + $0x8] sm:$0xf]
        %v375 = vld [vmem:[%s339 + $0xc] sm:$0xf]
        %v376 = vld [vmem:[%s339 + $0x10] sm:$0xf]
        %v377 = vld [vmem:[%s339 + $0x14] sm:$0xf]
        %v378 = vld [vmem:[%s339 + $0x18] sm:$0xf]
        %v379 = vld [vmem:[%s339 + $0x1c] sm:$0xf]
        %v380 = vld [vmem:[%s339 + $0x20] sm:$0xf]
        %v381 = vld [vmem:[%s339 + $0x24] sm:$0xf]
        %v382 = vld [vmem:[%s339 + $0x28] sm:$0xf]
        %v383 = vld [vmem:[%s339 + $0x2c] sm:$0xf]
        %v384 = vld [vmem:[%s339 + $0x30] sm:$0xf]
        %v385 = vld [vmem:[%s339 + $0x34] sm:$0xf]
        %v386 = vld [vmem:[%s339 + $0x38] sm:$0xf]
        %v387 = vld [vmem:[%s339 + $0x3c] sm:$0xf]
        %v388 = vld [vmem:[%s2] sm:$0xf]
        %v389 = vld [vmem:[%s2 + $0x4] sm:$0xf]
        %v390 = vld [vmem:[%s2 + $0x8] sm:$0xf]
        %v391 = vld [vmem:[%s2 + $0xc] sm:$0xf]
        %v392 = vld [vmem:[%s2 + $0x10] sm:$0xf]
        %v393 = vld [vmem:[%s2 + $0x14] sm:$0xf]
        %v394 = vld [vmem:[%s2 + $0x18] sm:$0xf]
        %v395 = vld [vmem:[%s2 + $0x1c] sm:$0xf]
        %v396 = vld [vmem:[%s2 + $0x20] sm:$0xf]
        %v397 = vld [vmem:[%s2 + $0x24] sm:$0xf]
        %v398 = vld [vmem:[%s2 + $0x28] sm:$0xf]
        %v399 = vld [vmem:[%s2 + $0x2c] sm:$0xf]
        %v400 = vld [vmem:[%s2 + $0x30] sm:$0xf]
        %v401 = vld [vmem:[%s2 + $0x34] sm:$0xf]
        %v402 = vld [vmem:[%s2 + $0x38] sm:$0xf]
        %v403 = vld [vmem:[%s2 + $0x3c] sm:$0xf]
        %v420 = vunpack.c.l.b16 %v372
        %v421 = vunpack.c.l.b16 %v373
        %v422 = vunpack.c.l.b16 %v374
        %v423 = vunpack.c.l.b16 %v375
        %v424 = vunpack.c.l.b16 %v376
        %v425 = vunpack.c.l.b16 %v377
        %v426 = vunpack.c.l.b16 %v378
        %v427 = vunpack.c.l.b16 %v379
        %v428 = vunpack.c.l.b16 %v380
        %v429 = vunpack.c.l.b16 %v381
        %v430 = vunpack.c.l.b16 %v382
        %v431 = vunpack.c.l.b16 %v383
        %v432 = vunpack.c.l.b16 %v384
        %v433 = vunpack.c.l.b16 %v385
        %v434 = vunpack.c.l.b16 %v386
        %v435 = vunpack.c.l.b16 %v387
        %v436 = vpack.c.b16 %v421, %v420
        %v437 = vpack.c.b16 %v423, %v422
        %v438 = vpack.c.b16 %v425, %v424
        %v439 = vpack.c.b16 %v427, %v426
        %v440 = vpack.c.b16 %v429, %v428
        %v441 = vpack.c.b16 %v431, %v430
        %v442 = vpack.c.b16 %v433, %v432
        %v443 = vpack.c.b16 %v435, %v434
        %v468 = vunpack.c.l.b16 %v388
        %v469 = vunpack.c.l.b16 %v389
        %v470 = vunpack.c.l.b16 %v390
        %v471 = vunpack.c.l.b16 %v391
        %v472 = vunpack.c.l.b16 %v392
        %v473 = vunpack.c.l.b16 %v393
        %v474 = vunpack.c.l.b16 %v394
        %v475 = vunpack.c.l.b16 %v395
        %v476 = vunpack.c.l.b16 %v396
        %v477 = vunpack.c.l.b16 %v397
        %v478 = vunpack.c.l.b16 %v398
        %v479 = vunpack.c.l.b16 %v399
        %v480 = vunpack.c.l.b16 %v400
        %v481 = vunpack.c.l.b16 %v401
        %v482 = vunpack.c.l.b16 %v402
        %v483 = vunpack.c.l.b16 %v403
        %v484 = vpack.c.b16 %v469, %v468
        %v485 = vpack.c.b16 %v471, %v470
        %v486 = vpack.c.b16 %v473, %v472
        %v487 = vpack.c.b16 %v475, %v474
        %v488 = vpack.c.b16 %v477, %v476
        %v489 = vpack.c.b16 %v479, %v478
        %v490 = vpack.c.b16 %v481, %v480
        %v491 = vpack.c.b16 %v483, %v482
        %500 = vmatprep.subr.bf16.mxu0 0
        %501 = vmatpush1.bf16.msra.mxu0 %v484
        %502 = vmatprep.subr.bf16.mxu0 0
        %503 = vmatpush1.bf16.msra.mxu0 %v485
        %504 = vmatprep.subr.bf16.mxu0 0
        %505 = vmatpush1.bf16.msra.mxu0 %v486
        %506 = vmatprep.subr.bf16.mxu0 0
        %507 = vmatpush1.bf16.msra.mxu0 %v487
        %508 = vmatprep.subr.bf16.mxu0 0
        %509 = vmatpush1.bf16.msra.mxu0 %v488
        %510 = vmatprep.subr.bf16.mxu0 0
        %511 = vmatpush1.bf16.msra.mxu0 %v489
        %512 = vmatprep.subr.bf16.mxu0 0
        %513 = vmatpush1.bf16.msra.mxu0 %v490
        %514 = vmatprep.subr.bf16.mxu0 0
        %515 = vmatpush1.bf16.msra.mxu0 %v491
        %516 = vmatprep.subr.bf16.mxu0 0
        %517 = vmatpush1.bf16.msra.mxu0 0
        %518 = vmatprep.subr.bf16.mxu0 0
        %519 = vmatpush1.bf16.msra.mxu0 0
        %520 = vmatprep.subr.bf16.mxu0 0
        %521 = vmatpush1.bf16.msra.mxu0 0
        %522 = vmatprep.subr.bf16.mxu0 0
        %523 = vmatpush1.bf16.msra.mxu0 0
        %524 = vmatprep.subr.bf16.mxu0 0
        %525 = vmatpush1.bf16.msra.mxu0 0
        %526 = vmatprep.subr.bf16.mxu0 0
        %527 = vmatpush1.bf16.msra.mxu0 0
        %528 = vmatprep.subr.bf16.mxu0 0
        %529 = vmatpush1.bf16.msra.mxu0 0
        %530 = vmatprep.subr.bf16.mxu0 0
        %531 = vmatpush1.bf16.msra.mxu0 0
        %532 = vmatprep.mubr.bf16.mxu0 0
        %533 = vmatmul.mubr.bf16.gmra.mrb[0].mxu0 %v436
        %v534 = vpop.f32.mrb[0].mxu0
        %v535 = vadd.f32 0.0, %v534
        %v536 = vpop.f32.mrb[0].mxu0
        %v537 = vpop.f32.mrb[0].mxu0
        %v538 = vadd.f32 0.0, %v537
        %v539 = vpop.f32.mrb[0].mxu0
        %540 = vmatprep.mubr.bf16.mxu0 0
        %541 = vmatmul.mubr.bf16.gmra.mrb[0].mxu0 %v437
        %v542 = vpop.f32.mrb[0].mxu0
        %v543 = vadd.f32 0.0, %v542
        %v544 = vpop.f32.mrb[0].mxu0
        %v545 = vpop.f32.mrb[0].mxu0
        %v546 = vadd.f32 0.0, %v545
        %v547 = vpop.f32.mrb[0].mxu0
        %548 = vmatprep.mubr.bf16.mxu0 0
        %549 = vmatmul.mubr.bf16.gmra.mrb[0].mxu0 %v438
        %v550 = vpop.f32.mrb[0].mxu0
        %v551 = vadd.f32 0.0, %v550
        %v552 = vpop.f32.mrb[0].mxu0
        %v553 = vpop.f32.mrb[0].mxu0
        %v554 = vadd.f32 0.0, %v553
        %v555 = vpop.f32.mrb[0].mxu0
        %556 = vmatprep.mubr.bf16.mxu0 0
        %557 = vmatmul.mubr.bf16.gmra.mrb[0].mxu0 %v439
        %v558 = vpop.f32.mrb[0].mxu0
        %v559 = vadd.f32 0.0, %v558
        %v560 = vpop.f32.mrb[0].mxu0
        %v561 = vpop.f32.mrb[0].mxu0
        %v562 = vadd.f32 0.0, %v561
        %v563 = vpop.f32.mrb[0].mxu0
        %564 = vmatprep.mubr.bf16.mxu0 0
        %565 = vmatmul.mubr.bf16.gmra.mrb[0].mxu0 %v440
        %v566 = vpop.f32.mrb[0].mxu0
        %v567 = vadd.f32 0.0, %v566
        %v568 = vpop.f32.mrb[0].mxu0
        %v569 = vpop.f32.mrb[0].mxu0
        %v570 = vadd.f32 0.0, %v569
        %v571 = vpop.f32.mrb[0].mxu0
        %572 = vmatprep.mubr.bf16.mxu0 0
        %573 = vmatmul.mubr.bf16.gmra.mrb[0].mxu0 %v441
        %v574 = vpop.f32.mrb[0].mxu0
        %v575 = vadd.f32 0.0, %v574
        %v576 = vpop.f32.mrb[0].mxu0
        %v577 = vpop.f32.mrb[0].mxu0
        %v578 = vadd.f32 0.0, %v577
        %v579 = vpop.f32.mrb[0].mxu0
        %580 = vmatprep.mubr.bf16.mxu0 0
        %581 = vmatmul.mubr.bf16.gmra.mrb[0].mxu0 %v442
        %v582 = vpop.f32.mrb[0].mxu0
        %v583 = vadd.f32 0.0, %v582
        %v584 = vpop.f32.mrb[0].mxu0
        %v585 = vpop.f32.mrb[0].mxu0
        %v586 = vadd.f32 0.0, %v585
        %v587 = vpop.f32.mrb[0].mxu0
        %588 = vmatprep.mubr.bf16.mxu0 0
        %589 = vmatmul.mubr.bf16.gmra.mrb[0].mxu0 %v443
        %v590 = vpop.f32.mrb[0].mxu0
        %v591 = vadd.f32 0.0, %v590
        %v592 = vpop.f32.mrb[0].mxu0
        %v593 = vpop.f32.mrb[0].mxu0
        %v594 = vadd.f32 0.0, %v593
        %v595 = vpop.f32.mrb[0].mxu0
        %596 = vdwg.mxu0
        %v597 = vld [vmem:[#allocation2] sm:$0xff]
        %v598 = vld [vmem:[#allocation2 + $0x8] sm:$0xff]
        %v599 = vld [vmem:[#allocation2 + $0x10] sm:$0xff]
        %v600 = vld [vmem:[#allocation2 + $0x18] sm:$0xff]
        %v601 = vld [vmem:[#allocation2 + $0x20] sm:$0xff]
        %v602 = vld [vmem:[#allocation2 + $0x28] sm:$0xff]
        %v603 = vld [vmem:[#allocation2 + $0x30] sm:$0xff]
        %v604 = vld [vmem:[#allocation2 + $0x38] sm:$0xff]
        %v605 = vld [vmem:[#allocation2 + $0x40] sm:$0xff]
        %v606 = vld [vmem:[#allocation2 + $0x48] sm:$0xff]
        %v607 = vld [vmem:[#allocation2 + $0x50] sm:$0xff]
        %v608 = vld [vmem:[#allocation2 + $0x58] sm:$0xff]
        %v609 = vld [vmem:[#allocation2 + $0x60] sm:$0xff]
        %v610 = vld [vmem:[#allocation2 + $0x68] sm:$0xff]
        %v611 = vld [vmem:[#allocation2 + $0x70] sm:$0xff]
        %v612 = vld [vmem:[#allocation2 + $0x78] sm:$0xff]
        %v613 = vld [vmem:[%s302] sm:$0xf]
        %v614 = vld [vmem:[%s302 + $0x4] sm:$0xf]
        %v615 = vld [vmem:[%s302 + $0x8] sm:$0xf]
        %v616 = vld [vmem:[%s302 + $0xc] sm:$0xf]
        %v617 = vld [vmem:[%s302 + $0x10] sm:$0xf]
        %v618 = vld [vmem:[%s302 + $0x14] sm:$0xf]
        %v619 = vld [vmem:[%s302 + $0x18] sm:$0xf]
        %v620 = vld [vmem:[%s302 + $0x1c] sm:$0xf]
        %v621 = vld [vmem:[%s302 + $0x20] sm:$0xf]
        %v622 = vld [vmem:[%s302 + $0x24] sm:$0xf]
        %v623 = vld [vmem:[%s302 + $0x28] sm:$0xf]
        %v624 = vld [vmem:[%s302 + $0x2c] sm:$0xf]
        %v625 = vld [vmem:[%s302 + $0x30] sm:$0xf]
        %v626 = vld [vmem:[%s302 + $0x34] sm:$0xf]
        %v627 = vld [vmem:[%s302 + $0x38] sm:$0xf]
        %v628 = vld [vmem:[%s302 + $0x3c] sm:$0xf]
        %v629 = vpack.c.bf16 %v538, %v535
        %v630 = vpack.c.bf16 %v546, %v543
        %v631 = vpack.c.bf16 %v554, %v551
        %v632 = vpack.c.bf16 %v562, %v559
        %v633 = vpack.c.bf16 %v570, %v567
        %v634 = vpack.c.bf16 %v578, %v575
        %v635 = vpack.c.bf16 %v586, %v583
        %v636 = vpack.c.bf16 %v594, %v591
        %v653 = vunpack.c.l.b16 %v613
        %v654 = vunpack.c.l.b16 %v614
        %v655 = vunpack.c.l.b16 %v615
        %v656 = vunpack.c.l.b16 %v616
        %v657 = vunpack.c.l.b16 %v617
        %v658 = vunpack.c.l.b16 %v618
        %v659 = vunpack.c.l.b16 %v619
        %v660 = vunpack.c.l.b16 %v620
        %v661 = vunpack.c.l.b16 %v621
        %v662 = vunpack.c.l.b16 %v622
        %v663 = vunpack.c.l.b16 %v623
        %v664 = vunpack.c.l.b16 %v624
        %v665 = vunpack.c.l.b16 %v625
        %v666 = vunpack.c.l.b16 %v626
        %v667 = vunpack.c.l.b16 %v627
        %v668 = vunpack.c.l.b16 %v628
        %v669 = vpack.c.b16 %v654, %v653
        %v670 = vpack.c.b16 %v656, %v655
        %v671 = vpack.c.b16 %v658, %v657
        %v672 = vpack.c.b16 %v660, %v659
        %v673 = vpack.c.b16 %v662, %v661
        %v674 = vpack.c.b16 %v664, %v663
        %v675 = vpack.c.b16 %v666, %v665
        %v676 = vpack.c.b16 %v668, %v667
        %685 = vmatprep.subr.bf16.mxu0 0
        %686 = vmatpush1.bf16.msra.mxu0 %v629
        %687 = vmatprep.subr.bf16.mxu0 0
        %688 = vmatpush1.bf16.msra.mxu0 %v630
        %689 = vmatprep.subr.bf16.mxu0 0
        %690 = vmatpush1.bf16.msra.mxu0 %v631
        %691 = vmatprep.subr.bf16.mxu0 0
        %692 = vmatpush1.bf16.msra.mxu0 %v632
        %693 = vmatprep.subr.bf16.mxu0 0
        %694 = vmatpush1.bf16.msra.mxu0 %v633
        %695 = vmatprep.subr.bf16.mxu0 0
        %696 = vmatpush1.bf16.msra.mxu0 %v634
        %697 = vmatprep.subr.bf16.mxu0 0
        %698 = vmatpush1.bf16.msra.mxu0 %v635
        %699 = vmatprep.subr.bf16.mxu0 0
        %700 = vmatpush1.bf16.msra.mxu0 %v636
        %701 = vmatprep.subr.bf16.mxu0 0
        %702 = vmatpush1.bf16.msra.mxu0 0
        %703 = vmatprep.subr.bf16.mxu0 0
        %704 = vmatpush1.bf16.msra.mxu0 0
        %705 = vmatprep.subr.bf16.mxu0 0
        %706 = vmatpush1.bf16.msra.mxu0 0
        %707 = vmatprep.subr.bf16.mxu0 0
        %708 = vmatpush1.bf16.msra.mxu0 0
        %709 = vmatprep.subr.bf16.mxu0 0
        %710 = vmatpush1.bf16.msra.mxu0 0
        %711 = vmatprep.subr.bf16.mxu0 0
        %712 = vmatpush1.bf16.msra.mxu0 0
        %713 = vmatprep.subr.bf16.mxu0 0
        %714 = vmatpush1.bf16.msra.mxu0 0
        %715 = vmatprep.subr.bf16.mxu0 0
        %716 = vmatpush1.bf16.msra.mxu0 0
        %717 = vmatprep.mubr.bf16.mxu0 0
        %718 = vmatmul.mubr.bf16.gmra.mrb[0].mxu0 %v669
        %v719 = vpop.f32.mrb[0].mxu0
        %v720 = vadd.f32 0.0, %v719
        %v721 = vpop.f32.mrb[0].mxu0
        %v722 = vpop.f32.mrb[0].mxu0
        %v723 = vadd.f32 0.0, %v722
        %v724 = vpop.f32.mrb[0].mxu0
        %725 = vmatprep.mubr.bf16.mxu0 0
        %726 = vmatmul.mubr.bf16.gmra.mrb[0].mxu0 %v670
        %v727 = vpop.f32.mrb[0].mxu0
        %v728 = vadd.f32 0.0, %v727
        %v729 = vpop.f32.mrb[0].mxu0
        %v730 = vpop.f32.mrb[0].mxu0
        %v731 = vadd.f32 0.0, %v730
        %v732 = vpop.f32.mrb[0].mxu0
        %733 = vmatprep.mubr.bf16.mxu0 0
        %734 = vmatmul.mubr.bf16.gmra.mrb[0].mxu0 %v671
        %v735 = vpop.f32.mrb[0].mxu0
        %v736 = vadd.f32 0.0, %v735
        %v737 = vpop.f32.mrb[0].mxu0
        %v738 = vpop.f32.mrb[0].mxu0
        %v739 = vadd.f32 0.0, %v738
        %v740 = vpop.f32.mrb[0].mxu0
        %741 = vmatprep.mubr.bf16.mxu0 0
        %742 = vmatmul.mubr.bf16.gmra.mrb[0].mxu0 %v672
        %v743 = vpop.f32.mrb[0].mxu0
        %v744 = vadd.f32 0.0, %v743
        %v745 = vpop.f32.mrb[0].mxu0
        %v746 = vpop.f32.mrb[0].mxu0
        %v747 = vadd.f32 0.0, %v746
        %v748 = vpop.f32.mrb[0].mxu0
        %749 = vmatprep.mubr.bf16.mxu0 0
        %750 = vmatmul.mubr.bf16.gmra.mrb[0].mxu0 %v673
        %v751 = vpop.f32.mrb[0].mxu0
        %v752 = vadd.f32 0.0, %v751
        %v753 = vpop.f32.mrb[0].mxu0
        %v754 = vpop.f32.mrb[0].mxu0
        %v755 = vadd.f32 0.0, %v754
        %v756 = vpop.f32.mrb[0].mxu0
        %757 = vmatprep.mubr.bf16.mxu0 0
        %758 = vmatmul.mubr.bf16.gmra.mrb[0].mxu0 %v674
        %v759 = vpop.f32.mrb[0].mxu0
        %v760 = vadd.f32 0.0, %v759
        %v761 = vpop.f32.mrb[0].mxu0
        %v762 = vpop.f32.mrb[0].mxu0
        %v763 = vadd.f32 0.0, %v762
        %v764 = vpop.f32.mrb[0].mxu0
        %765 = vmatprep.mubr.bf16.mxu0 0
        %766 = vmatmul.mubr.bf16.gmra.mrb[0].mxu0 %v675
        %v767 = vpop.f32.mrb[0].mxu0
        %v768 = vadd.f32 0.0, %v767
        %v769 = vpop.f32.mrb[0].mxu0
        %v770 = vpop.f32.mrb[0].mxu0
        %v771 = vadd.f32 0.0, %v770
        %v772 = vpop.f32.mrb[0].mxu0
        %773 = vmatprep.mubr.bf16.mxu0 0
        %774 = vmatmul.mubr.bf16.gmra.mrb[0].mxu0 %v676
        %v775 = vpop.f32.mrb[0].mxu0
        %v776 = vadd.f32 0.0, %v775
        %v777 = vpop.f32.mrb[0].mxu0
        %v778 = vpop.f32.mrb[0].mxu0
        %v779 = vadd.f32 0.0, %v778
        %v780 = vpop.f32.mrb[0].mxu0
        %781 = vdwg.mxu0
        %v782 = vadd.f32 %v597, %v720
        %v783 = vadd.f32 %v598, %v723
        %v784 = vadd.f32 %v599, %v728
        %v785 = vadd.f32 %v600, %v731
        %v786 = vadd.f32 %v601, %v736
        %v787 = vadd.f32 %v602, %v739
        %v788 = vadd.f32 %v603, %v744
        %v789 = vadd.f32 %v604, %v747
        %v790 = vadd.f32 %v605, %v752
        %v791 = vadd.f32 %v606, %v755
        %v792 = vadd.f32 %v607, %v760
        %v793 = vadd.f32 %v608, %v763
        %v794 = vadd.f32 %v609, %v768
        %v795 = vadd.f32 %v610, %v771
        %v796 = vadd.f32 %v611, %v776
        %v797 = vadd.f32 %v612, %v779
        %798 = vst [vmem:[#allocation2] sm:$0xff] %v782
        %799 = vst [vmem:[#allocation2 + $0x8] sm:$0xff] %v783
        %800 = vst [vmem:[#allocation2 + $0x10] sm:$0xff] %v784
        %801 = vst [vmem:[#allocation2 + $0x18] sm:$0xff] %v785
        %802 = vst [vmem:[#allocation2 + $0x20] sm:$0xff] %v786
        %803 = vst [vmem:[#allocation2 + $0x28] sm:$0xff] %v787
        %804 = vst [vmem:[#allocation2 + $0x30] sm:$0xff] %v788
        %805 = vst [vmem:[#allocation2 + $0x38] sm:$0xff] %v789
        %806 = vst [vmem:[#allocation2 + $0x40] sm:$0xff] %v790
        %807 = vst [vmem:[#allocation2 + $0x48] sm:$0xff] %v791
        %808 = vst [vmem:[#allocation2 + $0x50] sm:$0xff] %v792
        %809 = vst [vmem:[#allocation2 + $0x58] sm:$0xff] %v793
        %810 = vst [vmem:[#allocation2 + $0x60] sm:$0xff] %v794
        %811 = vst [vmem:[#allocation2 + $0x68] sm:$0xff] %v795
        %812 = vst [vmem:[#allocation2 + $0x70] sm:$0xff] %v796
        %813 = vst [vmem:[#allocation2 + $0x78] sm:$0xff] %v797
        %p814 = scmp.eq.s32.totalorder %s21, 1
        // Predicated region
        $region78: #{temporal_gcn_forward.5} parent=68 // pred_check
          %p815 = pneg %p814
        $region79: #{temporal_gcn_forward.5} parent=68 // pred_check_branch
          %817 = sbr.rel (%p815) target = $region81
        $region80: #{temporal_gcn_forward.5} parent=68 // pred_region
          %v818 = vld [vmem:[#allocation2] sm:$0xff]
          %v819 = vld [vmem:[#allocation2 + $0x8] sm:$0xff]
          %v820 = vld [vmem:[#allocation2 + $0x10] sm:$0xff]
          %v821 = vld [vmem:[#allocation2 + $0x18] sm:$0xff]
          %v822 = vld [vmem:[#allocation2 + $0x20] sm:$0xff]
          %v823 = vld [vmem:[#allocation2 + $0x28] sm:$0xff]
          %v824 = vld [vmem:[#allocation2 + $0x30] sm:$0xff]
          %v825 = vld [vmem:[#allocation2 + $0x38] sm:$0xff]
          %v826 = vld [vmem:[#allocation2 + $0x40] sm:$0xff]
          %v827 = vld [vmem:[#allocation2 + $0x48] sm:$0xff]
          %v828 = vld [vmem:[#allocation2 + $0x50] sm:$0xff]
          %v829 = vld [vmem:[#allocation2 + $0x58] sm:$0xff]
          %v830 = vld [vmem:[#allocation2 + $0x60] sm:$0xff]
          %v831 = vld [vmem:[#allocation2 + $0x68] sm:$0xff]
          %v832 = vld [vmem:[#allocation2 + $0x70] sm:$0xff]
          %v833 = vld [vmem:[#allocation2 + $0x78] sm:$0xff]
          %834 = vst [vmem:[%s345] sm:$0xff] %v818
          %835 = vst [vmem:[%s345 + $0x8] sm:$0xff] %v819
          %836 = vst [vmem:[%s345 + $0x10] sm:$0xff] %v820
          %837 = vst [vmem:[%s345 + $0x18] sm:$0xff] %v821
          %838 = vst [vmem:[%s345 + $0x20] sm:$0xff] %v822
          %839 = vst [vmem:[%s345 + $0x28] sm:$0xff] %v823
          %840 = vst [vmem:[%s345 + $0x30] sm:$0xff] %v824
          %841 = vst [vmem:[%s345 + $0x38] sm:$0xff] %v825
          %842 = vst [vmem:[%s345 + $0x40] sm:$0xff] %v826
          %843 = vst [vmem:[%s345 + $0x48] sm:$0xff] %v827
          %844 = vst [vmem:[%s345 + $0x50] sm:$0xff] %v828
          %845 = vst [vmem:[%s345 + $0x58] sm:$0xff] %v829
          %846 = vst [vmem:[%s345 + $0x60] sm:$0xff] %v830
          %847 = vst [vmem:[%s345 + $0x68] sm:$0xff] %v831
          %848 = vst [vmem:[%s345 + $0x70] sm:$0xff] %v832
          %849 = vst [vmem:[%s345 + $0x78] sm:$0xff] %v833
          %v850 = vadd.f32 %v818, %v819
          %v851 = vadd.f32 %v850, %v820
          %v852 = vadd.f32 %v851, %v821
          %v853 = vadd.f32 %v852, %v822
          %v854 = vadd.f32 %v853, %v823
          %v855 = vadd.f32 %v854, %v824
          %v856 = vadd.f32 %v855, %v825
          %v857 = vadd.f32 %v856, %v826
          %v858 = vadd.f32 %v857, %v827
          %v859 = vadd.f32 %v858, %v828
          %v860 = vadd.f32 %v859, %v829
          %v861 = vadd.f32 %v860, %v830
          %v862 = vadd.f32 %v861, %v831
          %v863 = vadd.f32 %v862, %v832
          %v864 = vadd.f32 %v863, %v833
          %v865 = vrot.slane %v864, 4
          %v866 = vadd.f32 %v864, %v865
          %v867 = vrot.slane %v866, 2
          %v868 = vadd.f32 %v866, %v867
          %v869 = vrot.slane %v868, 1
          %v870 = vadd.f32 %v868, %v869
          %v871 = vmul.f32 %v818, %v818
          %v872 = vmul.f32 %v819, %v819
          %v873 = vmul.f32 %v820, %v820
          %v874 = vmul.f32 %v821, %v821
          %v875 = vmul.f32 %v822, %v822
          %v876 = vmul.f32 %v823, %v823
          %v877 = vmul.f32 %v824, %v824
          %v878 = vmul.f32 %v825, %v825
          %v879 = vmul.f32 %v826, %v826
          %v880 = vmul.f32 %v827, %v827
          %v881 = vmul.f32 %v828, %v828
          %v882 = vmul.f32 %v829, %v829
          %v883 = vmul.f32 %v830, %v830
          %v884 = vmul.f32 %v831, %v831
          %v885 = vmul.f32 %v832, %v832
          %v886 = vmul.f32 %v833, %v833
          %v887 = vadd.f32 %v871, %v872
          %v888 = vadd.f32 %v887, %v873
          %v889 = vadd.f32 %v888, %v874
          %v890 = vadd.f32 %v889, %v875
          %v891 = vadd.f32 %v890, %v876
          %v892 = vadd.f32 %v891, %v877
          %v893 = vadd.f32 %v892, %v878
          %v894 = vadd.f32 %v893, %v879
          %v895 = vadd.f32 %v894, %v880
          %v896 = vadd.f32 %v895, %v881
          %v897 = vadd.f32 %v896, %v882
          %v898 = vadd.f32 %v897, %v883
          %v899 = vadd.f32 %v898, %v884
          %v900 = vadd.f32 %v899, %v885
          %v901 = vadd.f32 %v900, %v886
          %v902 = vrot.slane %v901, 4
          %v903 = vadd.f32 %v901, %v902
          %v904 = vrot.slane %v903, 2
          %v905 = vadd.f32 %v903, %v904
          %v906 = vrot.slane %v905, 1
          %v907 = vadd.f32 %v905, %v906
          %v908 = vlaneseq
          %v909 = vshrl.u32 %v908, 7
          %vm910 = vcmp.eq.s32.totalorder %v909, 0
          %vm911 = vcmp.eq.s32.totalorder %v909, 1
          %v912 = vsel %vm911, %v907, 0.0
          %v913 = vsel %vm910, %v870, %v912
          %914 = vst [vmem:[%s350] sm:$0xff] %v913
        $region81: #{temporal_gcn_forward.5} parent=68 // pred_fallthru
          _
        %s915 = smul.u32 16, %s20
        %p916 = scmp.lt.s32.totalorder %s915, 31
        %s917 = scalar_select %p916, %s915, 31
        %s918 = smul.addr %s917, 8
        %s919 = scalar_lea.vmem %s3, %s918
        %p920 = scmp.lt.s32.totalorder %s20, 1
        %s921 = scalar_select %p920, %s20, 1
        %s922 = smul.addr %s921, 8
        %s923 = scalar_lea.vmem %s4, %s922
        // Predicated region
        $region82: #{temporal_gcn_forward.5} parent=68 // pred_check
          %p924 = pneg %p121
        $region83: #{temporal_gcn_forward.5} parent=68 // pred_check_branch
          %926 = sbr.rel (%p924) target = $region85
        $region84: #{temporal_gcn_forward.5} parent=68 // pred_region
          %s927 = smul.u32 16, %s20
        $region85: #{temporal_gcn_forward.5} parent=68 // pred_fallthru
          _
        // Predicated region
        $region86: #{temporal_gcn_forward.5} parent=68 // pred_check
          %p928 = pneg %p147
        $region87: #{temporal_gcn_forward.5} parent=68 // pred_check_branch
          %930 = sbr.rel (%p928) target = $region89
        $region88: #{temporal_gcn_forward.5} parent=68 // pred_region
          _
        $region89: #{temporal_gcn_forward.5} parent=68 // pred_fallthru
          _
      $region69: #{temporal_gcn_forward.5} parent=5 // pred_fallthru
        _
      %p931 = scmp.le.s32.totalorder 2, %s11
      // Predicated region
      $region90: #{temporal_gcn_forward.5} parent=5 // pred_check
        %p932 = pneg %p931
      $region91: #{temporal_gcn_forward.5} parent=5 // pred_check_branch
        %934 = sbr.rel (%p932) target = $region93
      $region92: #{temporal_gcn_forward.5} parent=5 // pred_region
        %s935 = ssub.s32 %s11, 2
        // Predicated region
        $region94: #{temporal_gcn_forward.5} parent=92 // pred_check
          %p936 = pneg %p127
        $region95: #{temporal_gcn_forward.5} parent=92 // pred_check_branch
          %938 = sbr.rel (%p936) target = $region97
        $region96: #{temporal_gcn_forward.5} parent=92 // pred_region
          %s939 = smul.u32 16, %s22
          %p940 = scmp.lt.s32.totalorder %s939, 31
          %s941 = scalar_select %p940, %s939, 31
          %s942 = smul.addr %s941, 8
          %s943 = scalar_lea.vmem %s3, %s942
        $region97: #{temporal_gcn_forward.5} parent=92 // pred_fallthru
          _
        // Predicated region
        $region98: #{temporal_gcn_forward.5} parent=92 // pred_check
          %p944 = pneg %p153
        $region99: #{temporal_gcn_forward.5} parent=92 // pred_check_branch
          %946 = sbr.rel (%p944) target = $region101
        $region100: #{temporal_gcn_forward.5} parent=92 // pred_region
          %p947 = scmp.lt.s32.totalorder %s22, 1
          %s948 = scalar_select %p947, %s22, 1
          %s949 = smul.addr %s948, 8
          %s950 = scalar_lea.vmem %s4, %s949
        $region101: #{temporal_gcn_forward.5} parent=92 // pred_fallthru
          _
      $region93: #{temporal_gcn_forward.5} parent=5 // pred_fallthru
        _
    $region6: #{temporal_gcn_forward.5} parent=1 // loop_footer
      %s15 = sadd.s32 1, %s11
    $region7: #{temporal_gcn_forward.5} parent=1 // loop_footer_branch
      %10 = sbr.rel target = $region3
    $region8: #{temporal_gcn_forward.5} parent=1 // loop_exit
      _

// kernel: temporal_gcn_forward.6
$region0: #{temporal_gcn_forward.6}
  #allocation0 [shape = 'u32[]', space=smem, size = 0x4, offset = 0x4, fixed_abs, tag = 'smem constant byte address 0x4 - core index']
  #allocation1 [shape = 'u32[144,128]{1,0:T(1,128)}', space=vmem, size = 0x12000, scoped, tag = 'internal scratch']
  %s0 = inlined_call_operand.vmem [shape: f32[256,128], index: 0, kind: input, shape index: {}]
  %s1 = inlined_call_operand.vmem [shape: f32[1,128], index: 1, kind: input, shape index: {}]
  %s2 = inlined_call_operand.vmem [shape: f32[1,128], index: 2, kind: input, shape index: {}]
  %s3 = inlined_call_operand.vmem [shape: bf16[256,128], index: 3, kind: output, shape index: {}]
  %s4 = sld [smem:[#allocation0]]
  $region45: #{temporal_gcn_forward.6} parent=0
    _
  %s6 = ssub.s32 1, %s4
  %s7 = scalar_select 0, %s6, %s4
  loop: start=0, step=1, limit=4
  $region2: #{temporal_gcn_forward.6} parent=0 // loop_pre_header
    _
  $region3: #{temporal_gcn_forward.6} parent=0 // loop_header
    %s9 = sphi 0, %s13
    %p10 = scmp.ge.s32.totalorder %s9, 4
    %s19 = sphi 0, %s21
    %s22 = sphi 0, %s19
    %s23 = sphi 0, %s22
    %s39 = sphi 0, %s23
    %s43 = sphi 0, %s43
    %s45 = sphi 0, %s43
    %s46 = sphi 0, %s45
    %s60 = sphi 0, %s46
    %s64 = sphi 0, %s64
    %s66 = sphi 0, %s64
    %s67 = sphi 0, %s66
    %s81 = sphi 0, %s67
    %s87 = sphi 0, %s89
    %s90 = sphi 0, %s87
    %s91 = sphi 0, %s90
    %s107 = sphi 0, %s91
  $region4: #{temporal_gcn_forward.6} parent=0 // loop_header_branch
    %12 = sbr.rel (%p10) target = $region8
  $region5: #{temporal_gcn_forward.6} parent=0 // loop_body
    %s14 = ssub.s32 %s9, 1
    %s15 = ssub.s32 %s9, 2
    %s16 = sadd.s32 %s9, 1
    %s17 = ssub.s32 %s9, %s16
    %p18 = scmp.eq.s32.totalorder %s17, 0
    %s20 = sadd.s32 %s19, 1
    %s21 = scalar_select %p18, %s19, %s20
    %p24 = pneg %p18
    %p25 = scmp.eq.s32.totalorder %s9, 1
    %p26 = por %p24, %p25
    %p27 = scmp.ne.s32.totalorder %s19, %s22
    %p28 = scmp.eq.s32.totalorder %s9, 0
    %p29 = por %p27, %p28
    %p30 = scmp.ne.s32.totalorder %s19, %s22
    %p31 = scmp.eq.s32.totalorder %s14, 1
    %p32 = por %p30, %p31
    %p33 = scmp.ne.s32.totalorder %s22, %s23
    %p34 = scmp.eq.s32.totalorder %s14, 0
    %p35 = por %p33, %p34
    %p36 = scmp.ne.s32.totalorder %s22, %s23
    %p37 = scmp.eq.s32.totalorder %s15, 1
    %p38 = por %p36, %p37
    %p40 = scmp.ne.s32.totalorder %s23, %s39
    %p41 = scmp.eq.s32.totalorder %s15, 0
    %p42 = por %p40, %p41
    %s44 = sadd.s32 %s43, 1
    %p47 = scmp.eq.s32.totalorder %s9, 1
    %p48 = scmp.ne.s32.totalorder %s43, %s45
    %p49 = scmp.eq.s32.totalorder %s9, 0
    %p50 = por %p48, %p49
    %p51 = scmp.ne.s32.totalorder %s43, %s45
    %p52 = scmp.eq.s32.totalorder %s14, 1
    %p53 = por %p51, %p52
    %p54 = scmp.ne.s32.totalorder %s45, %s46
    %p55 = scmp.eq.s32.totalorder %s14, 0
    %p56 = por %p54, %p55
    %p57 = scmp.ne.s32.totalorder %s45, %s46
    %p58 = scmp.eq.s32.totalorder %s15, 1
    %p59 = por %p57, %p58
    %p61 = scmp.ne.s32.totalorder %s46, %s60
    %p62 = scmp.eq.s32.totalorder %s15, 0
    %p63 = por %p61, %p62
    %s65 = sadd.s32 %s64, 1
    %p68 = scmp.eq.s32.totalorder %s9, 1
    %p69 = scmp.ne.s32.totalorder %s64, %s66
    %p70 = scmp.eq.s32.totalorder %s9, 0
    %p71 = por %p69, %p70
    %p72 = scmp.ne.s32.totalorder %s64, %s66
    %p73 = scmp.eq.s32.totalorder %s14, 1
    %p74 = por %p72, %p73
    %p75 = scmp.ne.s32.totalorder %s66, %s67
    %p76 = scmp.eq.s32.totalorder %s14, 0
    %p77 = por %p75, %p76
    %p78 = scmp.ne.s32.totalorder %s66, %s67
    %p79 = scmp.eq.s32.totalorder %s15, 1
    %p80 = por %p78, %p79
    %p82 = scmp.ne.s32.totalorder %s67, %s81
    %p83 = scmp.eq.s32.totalorder %s15, 0
    %p84 = por %p82, %p83
    %s85 = ssub.s32 %s9, %s16
    %p86 = scmp.eq.s32.totalorder %s85, 0
    %s88 = sadd.s32 %s87, 1
    %s89 = scalar_select %p86, %s87, %s88
    %p92 = pneg %p86
    %p93 = scmp.eq.s32.totalorder %s9, 1
    %p94 = por %p92, %p93
    %p95 = scmp.ne.s32.totalorder %s87, %s90
    %p96 = scmp.eq.s32.totalorder %s9, 0
    %p97 = por %p95, %p96
    %p98 = scmp.ne.s32.totalorder %s87, %s90
    %p99 = scmp.eq.s32.totalorder %s14, 1
    %p100 = por %p98, %p99
    %p101 = scmp.ne.s32.totalorder %s90, %s91
    %p102 = scmp.eq.s32.totalorder %s14, 0
    %p103 = por %p101, %p102
    %p104 = scmp.ne.s32.totalorder %s90, %s91
    %p105 = scmp.eq.s32.totalorder %s15, 1
    %p106 = por %p104, %p105
    %p108 = scmp.ne.s32.totalorder %s91, %s107
    %p109 = scmp.eq.s32.totalorder %s15, 0
    %p110 = por %p108, %p109
    %p111 = scmp.le.s32.totalorder 1, %s9
    %p112 = scmp.lt.s32.totalorder %s9, 3
    %p113 = pnand %p111, %p112
    %p114 = pneg %p113
    // Predicated region
    $region9: #{temporal_gcn_forward.6} parent=5 // pred_check
      _
    $region10: #{temporal_gcn_forward.6} parent=5 // pred_check_branch
      %116 = sbr.rel (%p113) target = $region12
    $region11: #{temporal_gcn_forward.6} parent=5 // pred_region
      %s117 = ssub.s32 %s9, 1
      // Predicated region
      $region13: #{temporal_gcn_forward.6} parent=11 // pred_check
        %p118 = pneg %p56
      $region14: #{temporal_gcn_forward.6} parent=11 // pred_check_branch
        %120 = sbr.rel (%p118) target = $region16
      $region15: #{temporal_gcn_forward.6} parent=11 // pred_region
        _
      $region16: #{temporal_gcn_forward.6} parent=11 // pred_fallthru
        _
      // Predicated region
      $region17: #{temporal_gcn_forward.6} parent=11 // pred_check
        %p121 = pneg %p77
      $region18: #{temporal_gcn_forward.6} parent=11 // pred_check_branch
        %123 = sbr.rel (%p121) target = $region20
      $region19: #{temporal_gcn_forward.6} parent=11 // pred_region
        _
      $region20: #{temporal_gcn_forward.6} parent=11 // pred_fallthru
        _
    $region12: #{temporal_gcn_forward.6} parent=5 // pred_fallthru
      _
    %p124 = scmp.lt.s32.totalorder %s9, 2
    // Predicated region
    $region21: #{temporal_gcn_forward.6} parent=5 // pred_check
      %p125 = pneg %p124
    $region22: #{temporal_gcn_forward.6} parent=5 // pred_check_branch
      %127 = sbr.rel (%p125) target = $region24
    $region23: #{temporal_gcn_forward.6} parent=5 // pred_region
      // Predicated region
      $region25: #{temporal_gcn_forward.6} parent=23 // pred_check
        %p128 = pneg %p29
      $region26: #{temporal_gcn_forward.6} parent=23 // pred_check_branch
        %130 = sbr.rel (%p128) target = $region28
      $region27: #{temporal_gcn_forward.6} parent=23 // pred_region
        %s131 = smul.u32 16, %s9
        %p132 = scmp.lt.s32.totalorder %s131, 31
        %s133 = scalar_select %p132, %s131, 31
        %s134 = smul.addr %s133, 8
        %s135 = scalar_lea.vmem %s0, %s134
        %s136 = smul.u32 16, %s9
      $region28: #{temporal_gcn_forward.6} parent=23 // pred_fallthru
        _
    $region24: #{temporal_gcn_forward.6} parent=5 // pred_fallthru
      _
    %p137 = scmp.le.s32.totalorder 1, %s9
    %p138 = scmp.lt.s32.totalorder %s9, 3
    %p139 = pnand %p137, %p138
    %p140 = pneg %p139
    // Predicated region
    $region29: #{temporal_gcn_forward.6} parent=5 // pred_check
      _
    $region30: #{temporal_gcn_forward.6} parent=5 // pred_check_branch
      %142 = sbr.rel (%p139) target = $region32
    $region31: #{temporal_gcn_forward.6} parent=5 // pred_region
      %s143 = ssub.s32 %s9, 1
      %s144 = smul.u32 16, %s14
      %p145 = scmp.lt.s32.totalorder %s144, 31
      %s146 = scalar_select %p145, %s144, 31
      %s147 = smul.addr %s146, 8
      %s148 = scalar_lea.vmem %s0, %s147
      %p149 = pneg %p35
      %p150 = pneg %p32
      %p151 = pneg %p56
      %p152 = pneg %p53
      %p153 = pneg %p77
      %p154 = pneg %p74
      %p155 = pneg %p103
      %p156 = pneg %p100
      %s157 = smul.u32 16, %s14
      %p158 = scmp.lt.s32.totalorder %s157, 31
      %s159 = scalar_select %p158, %s157, 31
      %s160 = smul.addr %s159, 4
      %s161 = scalar_lea.vmem %s3, %s160
      %s162 = smul.u32 16, %s14
      %p163 = scmp.lt.s32.totalorder %s162, 31
      %s164 = scalar_select %p163, %s162, 31
      %s165 = smul.addr %s164, 8
      %s166 = scalar_lea.vmem %s0, %s165
      %s167 = smul.u32 16, %s14
      %s168 = smul.u32 16, %s14
      %p169 = scmp.lt.s32.totalorder %s168, 31
      %s170 = scalar_select %p169, %s168, 31
      %s171 = smul.addr %s170, 4
      %s172 = scalar_lea.vmem %s3, %s171
      %s173 = smul.u32 16, %s14
      %v174 = vld [vmem:[%s166] sm:$0xff]
      %v175 = vld [vmem:[%s166 + $0x8] sm:$0xff]
      %v176 = vld [vmem:[%s166 + $0x10] sm:$0xff]
      %v177 = vld [vmem:[%s166 + $0x18] sm:$0xff]
      %v178 = vld [vmem:[%s166 + $0x20] sm:$0xff]
      %v179 = vld [vmem:[%s166 + $0x28] sm:$0xff]
      %v180 = vld [vmem:[%s166 + $0x30] sm:$0xff]
      %v181 = vld [vmem:[%s166 + $0x38] sm:$0xff]
      %v182 = vld [vmem:[%s166 + $0x40] sm:$0xff]
      %v183 = vld [vmem:[%s166 + $0x48] sm:$0xff]
      %v184 = vld [vmem:[%s166 + $0x50] sm:$0xff]
      %v185 = vld [vmem:[%s166 + $0x58] sm:$0xff]
      %v186 = vld [vmem:[%s166 + $0x60] sm:$0xff]
      %v187 = vld [vmem:[%s166 + $0x68] sm:$0xff]
      %v188 = vld [vmem:[%s166 + $0x70] sm:$0xff]
      %v189 = vld [vmem:[%s166 + $0x78] sm:$0xff]
      %v190 = vld [vmem:[%s1] sm:$0x1]
      %v192 = vlaneseq
      %v193 = vshrl.u32 %v192, 7
      %v194 = vsub.s32 0, %v193
      %v195 = vrot.slane %v190, %v194
      %v197 = vmul.f32 %v174, %v195
      %v198 = vmul.f32 %v175, %v195
      %v199 = vmul.f32 %v176, %v195
      %v200 = vmul.f32 %v177, %v195
      %v201 = vmul.f32 %v178, %v195
      %v202 = vmul.f32 %v179, %v195
      %v203 = vmul.f32 %v180, %v195
      %v204 = vmul.f32 %v181, %v195
      %v205 = vmul.f32 %v182, %v195
      %v206 = vmul.f32 %v183, %v195
      %v207 = vmul.f32 %v184, %v195
      %v208 = vmul.f32 %v185, %v195
      %v209 = vmul.f32 %v186, %v195
      %v210 = vmul.f32 %v187, %v195
      %v211 = vmul.f32 %v188, %v195
      %v212 = vmul.f32 %v189, %v195
      %v213 = vld [vmem:[%s2] sm:$0x1]
      %v215 = vlaneseq
      %v216 = vshrl.u32 %v215, 7
      %v217 = vsub.s32 0, %v216
      %v218 = vrot.slane %v213, %v217
      %v220 = vadd.f32 %v197, %v218
      %v221 = vadd.f32 %v198, %v218
      %v222 = vadd.f32 %v199, %v218
      %v223 = vadd.f32 %v200, %v218
      %v224 = vadd.f32 %v201, %v218
      %v225 = vadd.f32 %v202, %v218
      %v226 = vadd.f32 %v203, %v218
      %v227 = vadd.f32 %v204, %v218
      %v228 = vadd.f32 %v205, %v218
      %v229 = vadd.f32 %v206, %v218
      %v230 = vadd.f32 %v207, %v218
      %v231 = vadd.f32 %v208, %v218
      %v232 = vadd.f32 %v209, %v218
      %v233 = vadd.f32 %v210, %v218
      %v234 = vadd.f32 %v211, %v218
      %v235 = vadd.f32 %v212, %v218
      %v236 = vmax.f32 %v220, 0.0
      %v237 = vmax.f32 %v221, 0.0
      %v238 = vmax.f32 %v222, 0.0
      %v239 = vmax.f32 %v223, 0.0
      %v240 = vmax.f32 %v224, 0.0
      %v241 = vmax.f32 %v225, 0.0
      %v242 = vmax.f32 %v226, 0.0
      %v243 = vmax.f32 %v227, 0.0
      %v244 = vmax.f32 %v228, 0.0
      %v245 = vmax.f32 %v229, 0.0
      %v246 = vmax.f32 %v230, 0.0
      %v247 = vmax.f32 %v231, 0.0
      %v248 = vmax.f32 %v232, 0.0
      %v249 = vmax.f32 %v233, 0.0
      %v250 = vmax.f32 %v234, 0.0
      %v251 = vmax.f32 %v235, 0.0
      %v252 = vpack.c.bf16 %v237, %v236
      %v253 = vpack.c.bf16 %v239, %v238
      %v254 = vpack.c.bf16 %v241, %v240
      %v255 = vpack.c.bf16 %v243, %v242
      %v256 = vpack.c.bf16 %v245, %v244
      %v257 = vpack.c.bf16 %v247, %v246
      %v258 = vpack.c.bf16 %v249, %v248
      %v259 = vpack.c.bf16 %v251, %v250
      %v268 = vunpack.c.l.b16 %v252
      %v269 = vunpack.c.h.b16 %v252
      %v270 = vunpack.c.l.b16 %v253
      %v271 = vunpack.c.h.b16 %v253
      %v272 = vunpack.c.l.b16 %v254
      %v273 = vunpack.c.h.b16 %v254
      %v274 = vunpack.c.l.b16 %v255
      %v275 = vunpack.c.h.b16 %v255
      %v276 = vunpack.c.l.b16 %v256
      %v277 = vunpack.c.h.b16 %v256
      %v278 = vunpack.c.l.b16 %v257
      %v279 = vunpack.c.h.b16 %v257
      %v280 = vunpack.c.l.b16 %v258
      %v281 = vunpack.c.h.b16 %v258
      %v282 = vunpack.c.l.b16 %v259
      %v283 = vunpack.c.h.b16 %v259
      %v284 = vpack.c.b16 %v268, %v268
      %v285 = vpack.c.b16 %v269, %v269
      %v286 = vpack.c.b16 %v270, %v270
      %v287 = vpack.c.b16 %v271, %v271
      %v288 = vpack.c.b16 %v272, %v272
      %v289 = vpack.c.b16 %v273, %v273
      %v290 = vpack.c.b16 %v274, %v274
      %v291 = vpack.c.b16 %v275, %v275
      %v292 = vpack.c.b16 %v276, %v276
      %v293 = vpack.c.b16 %v277, %v277
      %v294 = vpack.c.b16 %v278, %v278
      %v295 = vpack.c.b16 %v279, %v279
      %v296 = vpack.c.b16 %v280, %v280
      %v297 = vpack.c.b16 %v281, %v281
      %v298 = vpack.c.b16 %v282, %v282
      %v299 = vpack.c.b16 %v283, %v283
      %316 = vst [vmem:[%s172] sm:$0xf] %v284
      %317 = vst [vmem:[%s172 + $0x4] sm:$0xf] %v285
      %318 = vst [vmem:[%s172 + $0x8] sm:$0xf] %v286
      %319 = vst [vmem:[%s172 + $0xc] sm:$0xf] %v287
      %320 = vst [vmem:[%s172 + $0x10] sm:$0xf] %v288
      %321 = vst [vmem:[%s172 + $0x14] sm:$0xf] %v289
      %322 = vst [vmem:[%s172 + $0x18] sm:$0xf] %v290
      %323 = vst [vmem:[%s172 + $0x1c] sm:$0xf] %v291
      %324 = vst [vmem:[%s172 + $0x20] sm:$0xf] %v292
      %325 = vst [vmem:[%s172 + $0x24] sm:$0xf] %v293
      %326 = vst [vmem:[%s172 + $0x28] sm:$0xf] %v294
      %327 = vst [vmem:[%s172 + $0x2c] sm:$0xf] %v295
      %328 = vst [vmem:[%s172 + $0x30] sm:$0xf] %v296
      %329 = vst [vmem:[%s172 + $0x34] sm:$0xf] %v297
      %330 = vst [vmem:[%s172 + $0x38] sm:$0xf] %v298
      %331 = vst [vmem:[%s172 + $0x3c] sm:$0xf] %v299
      %s332 = smul.u32 16, %s14
      %p333 = scmp.lt.s32.totalorder %s332, 31
      %s334 = scalar_select %p333, %s332, 31
      %s335 = smul.addr %s334, 4
      %s336 = scalar_lea.vmem %s3, %s335
      // Predicated region
      $region33: #{temporal_gcn_forward.6} parent=31 // pred_check
        %p337 = pneg %p100
      $region34: #{temporal_gcn_forward.6} parent=31 // pred_check_branch
        %339 = sbr.rel (%p337) target = $region36
      $region35: #{temporal_gcn_forward.6} parent=31 // pred_region
        %s340 = smul.u32 16, %s14
      $region36: #{temporal_gcn_forward.6} parent=31 // pred_fallthru
        _
    $region32: #{temporal_gcn_forward.6} parent=5 // pred_fallthru
      _
    %p341 = scmp.le.s32.totalorder 2, %s9
    // Predicated region
    $region37: #{temporal_gcn_forward.6} parent=5 // pred_check
      %p342 = pneg %p341
    $region38: #{temporal_gcn_forward.6} parent=5 // pred_check_branch
      %344 = sbr.rel (%p342) target = $region40
    $region39: #{temporal_gcn_forward.6} parent=5 // pred_region
      %s345 = ssub.s32 %s9, 2
      // Predicated region
      $region41: #{temporal_gcn_forward.6} parent=39 // pred_check
        %p346 = pneg %p106
      $region42: #{temporal_gcn_forward.6} parent=39 // pred_check_branch
        %348 = sbr.rel (%p346) target = $region44
      $region43: #{temporal_gcn_forward.6} parent=39 // pred_region
        %s349 = smul.u32 16, %s15
        %p350 = scmp.lt.s32.totalorder %s349, 31
        %s351 = scalar_select %p350, %s349, 31
        %s352 = smul.addr %s351, 4
        %s353 = scalar_lea.vmem %s3, %s352
      $region44: #{temporal_gcn_forward.6} parent=39 // pred_fallthru
        _
    $region40: #{temporal_gcn_forward.6} parent=5 // pred_fallthru
      _
  $region6: #{temporal_gcn_forward.6} parent=0 // loop_footer
    %s13 = sadd.s32 1, %s9
  $region7: #{temporal_gcn_forward.6} parent=0 // loop_footer_branch
    %8 = sbr.rel target = $region3
  $region8: #{temporal_gcn_forward.6} parent=0 // loop_exit
    _

// kernel: temporal_gcn_forward.9
$region0: #{temporal_gcn_forward.9}
  #allocation0 [shape = 'u32[]', space=smem, size = 0x4, offset = 0x4, fixed_abs, tag = 'smem constant byte address 0x4 - core index']
  #allocation1 [shape = 'u32[144,128]{1,0:T(1,128)}', space=vmem, size = 0x12000, scoped, tag = 'internal scratch']
  #allocation2 [shape = 'f32[8,128]{1,0:T(8,128)}', space=vmem, size = 0x1000, scoped, tag = 'scratch operand']
  %s0 = inlined_call_operand.vmem [shape: bf16[8,256], index: 0, kind: input, shape index: {}]
  %s1 = inlined_call_operand.vmem [shape: bf16[256,128], index: 1, kind: input, shape index: {}]
  %s2 = inlined_call_operand.vmem [shape: bf16[128,384], index: 2, kind: input, shape index: {}]
  %s3 = inlined_call_operand.vmem [shape: f32[1,384], index: 3, kind: input, shape index: {}]
  %s4 = inlined_call_operand.vmem [shape: bf16[128,128], index: 4, kind: input, shape index: {}]
  %s5 = inlined_call_operand.vmem [shape: f32[1,128], index: 5, kind: input, shape index: {}]
  %s6 = inlined_call_operand.vmem [shape: f32[8,128], index: 6, kind: output, shape index: {}]
  %s7 = sld [smem:[#allocation0]]
  $region65: #{temporal_gcn_forward.9} parent=0
    _
  %s9 = ssub.s32 1, %s7
  %s10 = scalar_select 0, %s9, %s7
  loop: start=0, step=1, limit=4
  $region2: #{temporal_gcn_forward.9} parent=0 // loop_pre_header
    _
  $region3: #{temporal_gcn_forward.9} parent=0 // loop_header
    %s12 = sphi 0, %s16
    %p13 = scmp.ge.s32.totalorder %s12, 4
    %s22 = sphi 0, %s24
    %s25 = sphi 0, %s22
    %s26 = sphi 0, %s25
    %s42 = sphi 0, %s26
    %s48 = sphi 0, %s50
    %s51 = sphi 0, %s48
    %s52 = sphi 0, %s51
    %s68 = sphi 0, %s52
    %s72 = sphi 0, %s72
    %s74 = sphi 0, %s72
    %s75 = sphi 0, %s74
    %s89 = sphi 0, %s75
    %s93 = sphi 0, %s93
    %s95 = sphi 0, %s93
    %s96 = sphi 0, %s95
    %s110 = sphi 0, %s96
    %s114 = sphi 0, %s114
    %s116 = sphi 0, %s114
    %s117 = sphi 0, %s116
    %s131 = sphi 0, %s117
    %s135 = sphi 0, %s135
    %s137 = sphi 0, %s135
    %s138 = sphi 0, %s137
    %s152 = sphi 0, %s138
    %s156 = sphi 0, %s156
    %s158 = sphi 0, %s156
    %s159 = sphi 0, %s158
    %s173 = sphi 0, %s159
  $region4: #{temporal_gcn_forward.9} parent=0 // loop_header_branch
    %15 = sbr.rel (%p13) target = $region8
  $region5: #{temporal_gcn_forward.9} parent=0 // loop_body
    %s17 = ssub.s32 %s12, 1
    %s18 = ssub.s32 %s12, 2
    %s19 = sadd.s32 %s12, 1
    %s20 = ssub.s32 %s12, %s19
    %p21 = scmp.eq.s32.totalorder %s20, 0
    %s23 = sadd.s32 %s22, 1
    %s24 = scalar_select %p21, %s22, %s23
    %p27 = pneg %p21
    %p28 = scmp.eq.s32.totalorder %s12, 1
    %p29 = por %p27, %p28
    %p30 = scmp.ne.s32.totalorder %s22, %s25
    %p31 = scmp.eq.s32.totalorder %s12, 0
    %p32 = por %p30, %p31
    %p33 = scmp.ne.s32.totalorder %s22, %s25
    %p34 = scmp.eq.s32.totalorder %s17, 1
    %p35 = por %p33, %p34
    %p36 = scmp.ne.s32.totalorder %s25, %s26
    %p37 = scmp.eq.s32.totalorder %s17, 0
    %p38 = por %p36, %p37
    %p39 = scmp.ne.s32.totalorder %s25, %s26
    %p40 = scmp.eq.s32.totalorder %s18, 1
    %p41 = por %p39, %p40
    %p43 = scmp.ne.s32.totalorder %s26, %s42
    %p44 = scmp.eq.s32.totalorder %s18, 0
    %p45 = por %p43, %p44
    %s46 = ssub.s32 %s12, %s19
    %p47 = scmp.eq.s32.totalorder %s46, 0
    %s49 = sadd.s32 %s48, 1
    %s50 = scalar_select %p47, %s48, %s49
    %p53 = pneg %p47
    %p54 = scmp.eq.s32.totalorder %s12, 1
    %p55 = por %p53, %p54
    %p56 = scmp.ne.s32.totalorder %s48, %s51
    %p57 = scmp.eq.s32.totalorder %s12, 0
    %p58 = por %p56, %p57
    %p59 = scmp.ne.s32.totalorder %s48, %s51
    %p60 = scmp.eq.s32.totalorder %s17, 1
    %p61 = por %p59, %p60
    %p62 = scmp.ne.s32.totalorder %s51, %s52
    %p63 = scmp.eq.s32.totalorder %s17, 0
    %p64 = por %p62, %p63
    %p65 = scmp.ne.s32.totalorder %s51, %s52
    %p66 = scmp.eq.s32.totalorder %s18, 1
    %p67 = por %p65, %p66
    %p69 = scmp.ne.s32.totalorder %s52, %s68
    %p70 = scmp.eq.s32.totalorder %s18, 0
    %p71 = por %p69, %p70
    %s73 = sadd.s32 %s72, 1
    %p76 = scmp.eq.s32.totalorder %s12, 1
    %p77 = scmp.ne.s32.totalorder %s72, %s74
    %p78 = scmp.eq.s32.totalorder %s12, 0
    %p79 = por %p77, %p78
    %p80 = scmp.ne.s32.totalorder %s72, %s74
    %p81 = scmp.eq.s32.totalorder %s17, 1
    %p82 = por %p80, %p81
    %p83 = scmp.ne.s32.totalorder %s74, %s75
    %p84 = scmp.eq.s32.totalorder %s17, 0
    %p85 = por %p83, %p84
    %p86 = scmp.ne.s32.totalorder %s74, %s75
    %p87 = scmp.eq.s32.totalorder %s18, 1
    %p88 = por %p86, %p87
    %p90 = scmp.ne.s32.totalorder %s75, %s89
    %p91 = scmp.eq.s32.totalorder %s18, 0
    %p92 = por %p90, %p91
    %s94 = sadd.s32 %s93, 1
    %p97 = scmp.eq.s32.totalorder %s12, 1
    %p98 = scmp.ne.s32.totalorder %s93, %s95
    %p99 = scmp.eq.s32.totalorder %s12, 0
    %p100 = por %p98, %p99
    %p101 = scmp.ne.s32.totalorder %s93, %s95
    %p102 = scmp.eq.s32.totalorder %s17, 1
    %p103 = por %p101, %p102
    %p104 = scmp.ne.s32.totalorder %s95, %s96
    %p105 = scmp.eq.s32.totalorder %s17, 0
    %p106 = por %p104, %p105
    %p107 = scmp.ne.s32.totalorder %s95, %s96
    %p108 = scmp.eq.s32.totalorder %s18, 1
    %p109 = por %p107, %p108
    %p111 = scmp.ne.s32.totalorder %s96, %s110
    %p112 = scmp.eq.s32.totalorder %s18, 0
    %p113 = por %p111, %p112
    %s115 = sadd.s32 %s114, 1
    %p118 = scmp.eq.s32.totalorder %s12, 1
    %p119 = scmp.ne.s32.totalorder %s114, %s116
    %p120 = scmp.eq.s32.totalorder %s12, 0
    %p121 = por %p119, %p120
    %p122 = scmp.ne.s32.totalorder %s114, %s116
    %p123 = scmp.eq.s32.totalorder %s17, 1
    %p124 = por %p122, %p123
    %p125 = scmp.ne.s32.totalorder %s116, %s117
    %p126 = scmp.eq.s32.totalorder %s17, 0
    %p127 = por %p125, %p126
    %p128 = scmp.ne.s32.totalorder %s116, %s117
    %p129 = scmp.eq.s32.totalorder %s18, 1
    %p130 = por %p128, %p129
    %p132 = scmp.ne.s32.totalorder %s117, %s131
    %p133 = scmp.eq.s32.totalorder %s18, 0
    %p134 = por %p132, %p133
    %s136 = sadd.s32 %s135, 1
    %p139 = scmp.eq.s32.totalorder %s12, 1
    %p140 = scmp.ne.s32.totalorder %s135, %s137
    %p141 = scmp.eq.s32.totalorder %s12, 0
    %p142 = por %p140, %p141
    %p143 = scmp.ne.s32.totalorder %s135, %s137
    %p144 = scmp.eq.s32.totalorder %s17, 1
    %p145 = por %p143, %p144
    %p146 = scmp.ne.s32.totalorder %s137, %s138
    %p147 = scmp.eq.s32.totalorder %s17, 0
    %p148 = por %p146, %p147
    %p149 = scmp.ne.s32.totalorder %s137, %s138
    %p150 = scmp.eq.s32.totalorder %s18, 1
    %p151 = por %p149, %p150
    %p153 = scmp.ne.s32.totalorder %s138, %s152
    %p154 = scmp.eq.s32.totalorder %s18, 0
    %p155 = por %p153, %p154
    %s157 = sadd.s32 %s156, 1
    %p160 = scmp.eq.s32.totalorder %s12, 1
    %p161 = scmp.ne.s32.totalorder %s156, %s158
    %p162 = scmp.eq.s32.totalorder %s12, 0
    %p163 = por %p161, %p162
    %p164 = scmp.ne.s32.totalorder %s156, %s158
    %p165 = scmp.eq.s32.totalorder %s17, 1
    %p166 = por %p164, %p165
    %p167 = scmp.ne.s32.totalorder %s158, %s159
    %p168 = scmp.eq.s32.totalorder %s17, 0
    %p169 = por %p167, %p168
    %p170 = scmp.ne.s32.totalorder %s158, %s159
    %p171 = scmp.eq.s32.totalorder %s18, 1
    %p172 = por %p170, %p171
    %p174 = scmp.ne.s32.totalorder %s159, %s173
    %p175 = scmp.eq.s32.totalorder %s18, 0
    %p176 = por %p174, %p175
    %p177 = scmp.le.s32.totalorder 1, %s12
    %p178 = scmp.lt.s32.totalorder %s12, 3
    %p179 = pnand %p177, %p178
    %p180 = pneg %p179
    // Predicated region
    $region9: #{temporal_gcn_forward.9} parent=5 // pred_check
      _
    $region10: #{temporal_gcn_forward.9} parent=5 // pred_check_branch
      %182 = sbr.rel (%p179) target = $region12
    $region11: #{temporal_gcn_forward.9} parent=5 // pred_region
      %s183 = ssub.s32 %s12, 1
      // Predicated region
      $region13: #{temporal_gcn_forward.9} parent=11 // pred_check
        %p184 = pneg %p85
      $region14: #{temporal_gcn_forward.9} parent=11 // pred_check_branch
        %186 = sbr.rel (%p184) target = $region16
      $region15: #{temporal_gcn_forward.9} parent=11 // pred_region
        _
      $region16: #{temporal_gcn_forward.9} parent=11 // pred_fallthru
        _
      // Predicated region
      $region17: #{temporal_gcn_forward.9} parent=11 // pred_check
        %p187 = pneg %p106
      $region18: #{temporal_gcn_forward.9} parent=11 // pred_check_branch
        %189 = sbr.rel (%p187) target = $region20
      $region19: #{temporal_gcn_forward.9} parent=11 // pred_region
        _
      $region20: #{temporal_gcn_forward.9} parent=11 // pred_fallthru
        _
      // Predicated region
      $region21: #{temporal_gcn_forward.9} parent=11 // pred_check
        %p190 = pneg %p127
      $region22: #{temporal_gcn_forward.9} parent=11 // pred_check_branch
        %192 = sbr.rel (%p190) target = $region24
      $region23: #{temporal_gcn_forward.9} parent=11 // pred_region
        _
      $region24: #{temporal_gcn_forward.9} parent=11 // pred_fallthru
        _
      // Predicated region
      $region25: #{temporal_gcn_forward.9} parent=11 // pred_check
        %p193 = pneg %p148
      $region26: #{temporal_gcn_forward.9} parent=11 // pred_check_branch
        %195 = sbr.rel (%p193) target = $region28
      $region27: #{temporal_gcn_forward.9} parent=11 // pred_region
        _
      $region28: #{temporal_gcn_forward.9} parent=11 // pred_fallthru
        _
    $region12: #{temporal_gcn_forward.9} parent=5 // pred_fallthru
      _
    %p196 = scmp.lt.s32.totalorder %s12, 2
    // Predicated region
    $region29: #{temporal_gcn_forward.9} parent=5 // pred_check
      %p197 = pneg %p196
    $region30: #{temporal_gcn_forward.9} parent=5 // pred_check_branch
      %199 = sbr.rel (%p197) target = $region32
    $region31: #{temporal_gcn_forward.9} parent=5 // pred_region
      // Predicated region
      $region33: #{temporal_gcn_forward.9} parent=31 // pred_check
        %p200 = pneg %p32
      $region34: #{temporal_gcn_forward.9} parent=31 // pred_check_branch
        %202 = sbr.rel (%p200) target = $region36
      $region35: #{temporal_gcn_forward.9} parent=31 // pred_region
        %p203 = scmp.lt.s32.totalorder %s12, 1
        %s204 = scalar_select %p203, %s12, 1
        %s205 = smul.addr %s204, 4
        %s206 = scalar_lea.vmem %s0, %s205
      $region36: #{temporal_gcn_forward.9} parent=31 // pred_fallthru
        _
      // Predicated region
      $region37: #{temporal_gcn_forward.9} parent=31 // pred_check
        %p207 = pneg %p58
      $region38: #{temporal_gcn_forward.9} parent=31 // pred_check_branch
        %209 = sbr.rel (%p207) target = $region40
      $region39: #{temporal_gcn_forward.9} parent=31 // pred_region
        %s210 = smul.u32 16, %s12
        %p211 = scmp.lt.s32.totalorder %s210, 31
        %s212 = scalar_select %p211, %s210, 31
        %s213 = smul.addr %s212, 4
        %s214 = scalar_lea.vmem %s1, %s213
        %s215 = smul.u32 16, %s12
      $region40: #{temporal_gcn_forward.9} parent=31 // pred_fallthru
        _
    $region32: #{temporal_gcn_forward.9} parent=5 // pred_fallthru
      _
    %p216 = scmp.le.s32.totalorder 1, %s12
    %p217 = scmp.lt.s32.totalorder %s12, 3
    %p218 = pnand %p216, %p217
    %p219 = pneg %p218
    // Predicated region
    $region41: #{temporal_gcn_forward.9} parent=5 // pred_check
      _
    $region42: #{temporal_gcn_forward.9} parent=5 // pred_check_branch
      %221 = sbr.rel (%p218) target = $region44
    $region43: #{temporal_gcn_forward.9} parent=5 // pred_region
      %s222 = ssub.s32 %s12, 1
      %p223 = scmp.lt.s32.totalorder %s17, 1
      %s224 = scalar_select %p223, %s17, 1
      %s225 = smul.addr %s224, 4
      %s226 = scalar_lea.vmem %s0, %s225
      %p227 = pneg %p38
      %p228 = pneg %p35
      %s229 = smul.u32 16, %s17
      %p230 = scmp.lt.s32.totalorder %s229, 31
      %s231 = scalar_select %p230, %s229, 31
      %s232 = smul.addr %s231, 4
      %s233 = scalar_lea.vmem %s1, %s232
      %p234 = pneg %p64
      %p235 = pneg %p61
      %p236 = pneg %p85
      %p237 = pneg %p82
      %p238 = pneg %p106
      %p239 = pneg %p103
      %p240 = pneg %p127
      %p241 = pneg %p124
      %p242 = pneg %p148
      %p243 = pneg %p145
      %p244 = pneg %p169
      %p245 = pneg %p166
      %p246 = scmp.lt.s32.totalorder %s17, 1
      %s247 = scalar_select %p246, %s17, 1
      %s248 = smul.addr %s247, 4
      %s249 = scalar_lea.vmem %s0, %s248
      %s250 = smul.u32 16, %s17
      %p251 = scmp.lt.s32.totalorder %s250, 31
      %s252 = scalar_select %p251, %s250, 31
      %s253 = smul.addr %s252, 4
      %s254 = scalar_lea.vmem %s1, %s253
      %s255 = smul.u32 16, %s17
      %p257 = scmp.eq.s32.totalorder %s17, 0
      // Predicated region
      $region45: #{temporal_gcn_forward.9} parent=43 // pred_check
        %p258 = pneg %p257
      $region46: #{temporal_gcn_forward.9} parent=43 // pred_check_branch
        %260 = sbr.rel (%p258) target = $region48
      $region47: #{temporal_gcn_forward.9} parent=43 // pred_region
        %261 = vst [vmem:[#allocation2] sm:$0xff] 0.0
      $region48: #{temporal_gcn_forward.9} parent=43 // pred_fallthru
        _
      %v262 = vld [vmem:[#allocation2] sm:$0xff]
      %v263 = vld [vmem:[%s249] sm:$0xf]
      %v264 = vld [vmem:[%s254] sm:$0xf]
      %v265 = vld [vmem:[%s254 + $0x4] sm:$0xf]
      %v266 = vld [vmem:[%s254 + $0x8] sm:$0xf]
      %v267 = vld [vmem:[%s254 + $0xc] sm:$0xf]
      %v268 = vld [vmem:[%s254 + $0x10] sm:$0xf]
      %v269 = vld [vmem:[%s254 + $0x14] sm:$0xf]
      %v270 = vld [vmem:[%s254 + $0x18] sm:$0xf]
      %v271 = vld [vmem:[%s254 + $0x1c] sm:$0xf]
      %v272 = vld [vmem:[%s254 + $0x20] sm:$0xf]
      %v273 = vld [vmem:[%s254 + $0x24] sm:$0xf]
      %v274 = vld [vmem:[%s254 + $0x28] sm:$0xf]
      %v275 = vld [vmem:[%s254 + $0x2c] sm:$0xf]
      %v276 = vld [vmem:[%s254 + $0x30] sm:$0xf]
      %v277 = vld [vmem:[%s254 + $0x34] sm:$0xf]
      %v278 = vld [vmem:[%s254 + $0x38] sm:$0xf]
      %v279 = vld [vmem:[%s254 + $0x3c] sm:$0xf]
      %v296 = vunpack.c.l.b16 %v264
      %v297 = vunpack.c.l.b16 %v265
      %v298 = vunpack.c.l.b16 %v266
      %v299 = vunpack.c.l.b16 %v267
      %v300 = vunpack.c.l.b16 %v268
      %v301 = vunpack.c.l.b16 %v269
      %v302 = vunpack.c.l.b16 %v270
      %v303 = vunpack.c.l.b16 %v271
      %v304 = vunpack.c.l.b16 %v272
      %v305 = vunpack.c.l.b16 %v273
      %v306 = vunpack.c.l.b16 %v274
      %v307 = vunpack.c.l.b16 %v275
      %v308 = vunpack.c.l.b16 %v276
      %v309 = vunpack.c.l.b16 %v277
      %v310 = vunpack.c.l.b16 %v278
      %v311 = vunpack.c.l.b16 %v279
      %v312 = vpack.c.b16 %v297, %v296
      %v313 = vpack.c.b16 %v299, %v298
      %v314 = vpack.c.b16 %v301, %v300
      %v315 = vpack.c.b16 %v303, %v302
      %v316 = vpack.c.b16 %v305, %v304
      %v317 = vpack.c.b16 %v307, %v306
      %v318 = vpack.c.b16 %v309, %v308
      %v319 = vpack.c.b16 %v311, %v310
      %328 = vmatprep.subr.bf16.mxu0 0
      %329 = vmatpush1.bf16.msra.mxu0 %v312
      %330 = vmatprep.subr.bf16.mxu0 0
      %331 = vmatpush1.bf16.msra.mxu0 %v313
      %332 = vmatprep.subr.bf16.mxu0 0
      %333 = vmatpush1.bf16.msra.mxu0 %v314
      %334 = vmatprep.subr.bf16.mxu0 0
      %335 = vmatpush1.bf16.msra.mxu0 %v315
      %336 = vmatprep.subr.bf16.mxu0 0
      %337 = vmatpush1.bf16.msra.mxu0 %v316
      %338 = vmatprep.subr.bf16.mxu0 0
      %339 = vmatpush1.bf16.msra.mxu0 %v317
      %340 = vmatprep.subr.bf16.mxu0 0
      %341 = vmatpush1.bf16.msra.mxu0 %v318
      %342 = vmatprep.subr.bf16.mxu0 0
      %343 = vmatpush1.bf16.msra.mxu0 %v319
      %344 = vmatprep.subr.bf16.mxu0 0
      %345 = vmatpush1.bf16.msra.mxu0 0
      %346 = vmatprep.subr.bf16.mxu0 0
      %347 = vmatpush1.bf16.msra.mxu0 0
      %348 = vmatprep.subr.bf16.mxu0 0
      %349 = vmatpush1.bf16.msra.mxu0 0
      %350 = vmatprep.subr.bf16.mxu0 0
      %351 = vmatpush1.bf16.msra.mxu0 0
      %352 = vmatprep.subr.bf16.mxu0 0
      %353 = vmatpush1.bf16.msra.mxu0 0
      %354 = vmatprep.subr.bf16.mxu0 0
      %355 = vmatpush1.bf16.msra.mxu0 0
      %356 = vmatprep.subr.bf16.mxu0 0
      %357 = vmatpush1.bf16.msra.mxu0 0
      %358 = vmatprep.subr.bf16.mxu0 0
      %359 = vmatpush1.bf16.msra.mxu0 0
      %360 = vmatprep.mubr.bf16.mxu0 0
      %361 = vmatmul.mubr.bf16.gmra.mrb[0].mxu0 %v263
      %v362 = vpop.f32.mrb[0].mxu0
      %v363 = vadd.f32 0.0, %v362
      %v364 = vpop.f32.mrb[0].mxu0
      %v365 = vpop.f32.mrb[0].mxu0
      %v366 = vpop.f32.mrb[0].mxu0
      %367 = vdwg.mxu0
      %v368 = vadd.f32 %v262, %v363
      %369 = vst [vmem:[#allocation2] sm:$0xff] %v368
      %p370 = scmp.eq.s32.totalorder %s17, 1
      // Predicated region
      $region49: #{temporal_gcn_forward.9} parent=43 // pred_check
        %p371 = pneg %p370
      $region50: #{temporal_gcn_forward.9} parent=43 // pred_check_branch
        %373 = sbr.rel (%p371) target = $region52
      $region51: #{temporal_gcn_forward.9} parent=43 // pred_region
        %v374 = vld [vmem:[#allocation2] sm:$0xff]
        %v375 = vpack.c.bf16 %v374, %v374
        %v376 = vld [vmem:[%s2] sm:$0xff]
        %v377 = vld [vmem:[%s2 + $0x8] sm:$0xf]
        %v378 = vld [vmem:[%s2 + $0xc] sm:$0xff]
        %v379 = vld [vmem:[%s2 + $0x14] sm:$0xf]
        %v380 = vld [vmem:[%s2 + $0x18] sm:$0xff]
        %v381 = vld [vmem:[%s2 + $0x20] sm:$0xf]
        %v382 = vld [vmem:[%s2 + $0x24] sm:$0xff]
        %v383 = vld [vmem:[%s2 + $0x2c] sm:$0xf]
        %v384 = vld [vmem:[%s2 + $0x30] sm:$0xff]
        %v385 = vld [vmem:[%s2 + $0x38] sm:$0xf]
        %v386 = vld [vmem:[%s2 + $0x3c] sm:$0xff]
        %v387 = vld [vmem:[%s2 + $0x44] sm:$0xf]
        %v388 = vld [vmem:[%s2 + $0x48] sm:$0xff]
        %v389 = vld [vmem:[%s2 + $0x50] sm:$0xf]
        %v390 = vld [vmem:[%s2 + $0x54] sm:$0xff]
        %v391 = vld [vmem:[%s2 + $0x5c] sm:$0xf]
        %v392 = vld [vmem:[%s2 + $0x60] sm:$0xff]
        %v393 = vld [vmem:[%s2 + $0x68] sm:$0xf]
        %v394 = vld [vmem:[%s2 + $0x6c] sm:$0xff]
        %v395 = vld [vmem:[%s2 + $0x74] sm:$0xf]
        %v396 = vld [vmem:[%s2 + $0x78] sm:$0xff]
        %v397 = vld [vmem:[%s2 + $0x80] sm:$0xf]
        %v398 = vld [vmem:[%s2 + $0x84] sm:$0xff]
        %v399 = vld [vmem:[%s2 + $0x8c] sm:$0xf]
        %v400 = vld [vmem:[%s2 + $0x90] sm:$0xff]
        %v401 = vld [vmem:[%s2 + $0x98] sm:$0xf]
        %v402 = vld [vmem:[%s2 + $0x9c] sm:$0xff]
        %v403 = vld [vmem:[%s2 + $0xa4] sm:$0xf]
        %v404 = vld [vmem:[%s2 + $0xa8] sm:$0xff]
        %v405 = vld [vmem:[%s2 + $0xb0] sm:$0xf]
        %v406 = vld [vmem:[%s2 + $0xb4] sm:$0xff]
        %v407 = vld [vmem:[%s2 + $0xbc] sm:$0xf]
        %v408 = vld [vmem:[%s3] sm:$0x7]
        %v410 = vlaneseq
        %v411 = vshrl.u32 %v410, 7
        %v412 = vsub.s32 0, %v411
        %v413 = vrot.slane %v408, %v412
        %v414 = vlaneseq
        %v415 = vshrl.u32 %v414, 7
        %v416 = vsub.s32 1, %v415
        %v417 = vrot.slane %v408, %v416
        %v418 = vlaneseq
        %v419 = vshrl.u32 %v418, 7
        %v420 = vsub.s32 2, %v419
        %v421 = vrot.slane %v408, %v420
        %v457 = vunpack.c.l.b16 %v376
        %v458 = vunpack.c.h.b16 %v376
        %v459 = vunpack.c.l.b16 %v377
        %v460 = vunpack.c.l.b16 %v378
        %v461 = vunpack.c.h.b16 %v378
        %v462 = vunpack.c.l.b16 %v379
        %v463 = vunpack.c.l.b16 %v380
        %v464 = vunpack.c.h.b16 %v380
        %v465 = vunpack.c.l.b16 %v381
        %v466 = vunpack.c.l.b16 %v382
        %v467 = vunpack.c.h.b16 %v382
        %v468 = vunpack.c.l.b16 %v383
        %v469 = vunpack.c.l.b16 %v384
        %v470 = vunpack.c.h.b16 %v384
        %v471 = vunpack.c.l.b16 %v385
        %v472 = vunpack.c.l.b16 %v386
        %v473 = vunpack.c.h.b16 %v386
        %v474 = vunpack.c.l.b16 %v387
        %v475 = vunpack.c.l.b16 %v388
        %v476 = vunpack.c.h.b16 %v388
        %v477 = vunpack.c.l.b16 %v389
        %v478 = vunpack.c.l.b16 %v390
        %v479 = vunpack.c.h.b16 %v390
        %v480 = vunpack.c.l.b16 %v391
        %v481 = vunpack.c.l.b16 %v392
        %v482 = vunpack.c.h.b16 %v392
        %v483 = vunpack.c.l.b16 %v393
        %v484 = vunpack.c.l.b16 %v394
        %v485 = vunpack.c.h.b16 %v394
        %v486 = vunpack.c.l.b16 %v395
        %v487 = vunpack.c.l.b16 %v396
        %v488 = vunpack.c.h.b16 %v396
        %v489 = vunpack.c.l.b16 %v397
        %v490 = vunpack.c.l.b16 %v398
        %v491 = vunpack.c.h.b16 %v398
        %v492 = vunpack.c.l.b16 %v399
        %v493 = vunpack.c.l.b16 %v400
        %v494 = vunpack.c.h.b16 %v400
        %v495 = vunpack.c.l.b16 %v401
        %v496 = vunpack.c.l.b16 %v402
        %v497 = vunpack.c.h.b16 %v402
        %v498 = vunpack.c.l.b16 %v403
        %v499 = vunpack.c.l.b16 %v404
        %v500 = vunpack.c.h.b16 %v404
        %v501 = vunpack.c.l.b16 %v405
        %v502 = vunpack.c.l.b16 %v406
        %v503 = vunpack.c.h.b16 %v406
        %v504 = vunpack.c.l.b16 %v407
        %v505 = vpack.c.b16 %v460, %v457
        %v506 = vpack.c.b16 %v461, %v458
        %v507 = vpack.c.b16 %v462, %v459
        %v508 = vpack.c.b16 %v466, %v463
        %v509 = vpack.c.b16 %v467, %v464
        %v510 = vpack.c.b16 %v468, %v465
        %v511 = vpack.c.b16 %v472, %v469
        %v512 = vpack.c.b16 %v473, %v470
        %v513 = vpack.c.b16 %v474, %v471
        %v514 = vpack.c.b16 %v478, %v475
        %v515 = vpack.c.b16 %v479, %v476
        %v516 = vpack.c.b16 %v480, %v477
        %v517 = vpack.c.b16 %v484, %v481
        %v518 = vpack.c.b16 %v485, %v482
        %v519 = vpack.c.b16 %v486, %v483
        %v520 = vpack.c.b16 %v490, %v487
        %v521 = vpack.c.b16 %v491, %v488
        %v522 = vpack.c.b16 %v492, %v489
        %v523 = vpack.c.b16 %v496, %v493
        %v524 = vpack.c.b16 %v497, %v494
        %v525 = vpack.c.b16 %v498, %v495
        %v526 = vpack.c.b16 %v502, %v499
        %v527 = vpack.c.b16 %v503, %v500
        %v528 = vpack.c.b16 %v504, %v501
        %553 = vmatprep.subr.bf16.mxu0 %v506
        %554 = vmatpush1.bf16.msra.mxu0 %v505
        %555 = vmatprep.subr.bf16.mxu0 %v509
        %556 = vmatpush1.bf16.msra.mxu0 %v508
        %557 = vmatprep.subr.bf16.mxu0 %v512
        %558 = vmatpush1.bf16.msra.mxu0 %v511
        %559 = vmatprep.subr.bf16.mxu0 %v515
        %560 = vmatpush1.bf16.msra.mxu0 %v514
        %561 = vmatprep.subr.bf16.mxu0 %v518
        %562 = vmatpush1.bf16.msra.mxu0 %v517
        %563 = vmatprep.subr.bf16.mxu0 %v521
        %564 = vmatpush1.bf16.msra.mxu0 %v520
        %565 = vmatprep.subr.bf16.mxu0 %v524
        %566 = vmatpush1.bf16.msra.mxu0 %v523
        %567 = vmatprep.subr.bf16.mxu0 %v527
        %568 = vmatpush1.bf16.msra.mxu0 %v526
        %569 = vmatprep.subr.bf16.mxu0 0
        %570 = vmatpush1.bf16.msra.mxu0 0
        %571 = vmatprep.subr.bf16.mxu0 0
        %572 = vmatpush1.bf16.msra.mxu0 0
        %573 = vmatprep.subr.bf16.mxu0 0
        %574 = vmatpush1.bf16.msra.mxu0 0
        %575 = vmatprep.subr.bf16.mxu0 0
        %576 = vmatpush1.bf16.msra.mxu0 0
        %577 = vmatprep.subr.bf16.mxu0 0
        %578 = vmatpush1.bf16.msra.mxu0 0
        %579 = vmatprep.subr.bf16.mxu0 0
        %580 = vmatpush1.bf16.msra.mxu0 0
        %581 = vmatprep.subr.bf16.mxu0 0
        %582 = vmatpush1.bf16.msra.mxu0 0
        %583 = vmatprep.subr.bf16.mxu0 0
        %584 = vmatpush1.bf16.msra.mxu0 0
        %585 = vmatprep.mubr.bf16.mxu0 0
        %586 = vmatmul.mubr.bf16.gmra.mrb[0].mxu0 %v375
        %v587 = vpop.f32.mrb[0].mxu0
        %v588 = vadd.f32 %v413, %v587
        %v589 = vpop.f32.mrb[0].mxu0
        %v590 = vadd.f32 %v417, %v589
        %v591 = vpop.f32.mrb[0].mxu0
        %v592 = vpop.f32.mrb[0].mxu0
        %593 = vdwg.mxu0
        %594 = vmatprep.subr.bf16.mxu0 0
        %595 = vmatpush1.bf16.msra.mxu0 %v507
        %596 = vmatprep.subr.bf16.mxu0 0
        %597 = vmatpush1.bf16.msra.mxu0 %v510
        %598 = vmatprep.subr.bf16.mxu0 0
        %599 = vmatpush1.bf16.msra.mxu0 %v513
        %600 = vmatprep.subr.bf16.mxu0 0
        %601 = vmatpush1.bf16.msra.mxu0 %v516
        %602 = vmatprep.subr.bf16.mxu0 0
        %603 = vmatpush1.bf16.msra.mxu0 %v519
        %604 = vmatprep.subr.bf16.mxu0 0
        %605 = vmatpush1.bf16.msra.mxu0 %v522
        %606 = vmatprep.subr.bf16.mxu0 0
        %607 = vmatpush1.bf16.msra.mxu0 %v525
        %608 = vmatprep.subr.bf16.mxu0 0
        %609 = vmatpush1.bf16.msra.mxu0 %v528
        %610 = vmatprep.subr.bf16.mxu0 0
        %611 = vmatpush1.bf16.msra.mxu0 0
        %612 = vmatprep.subr.bf16.mxu0 0
        %613 = vmatpush1.bf16.msra.mxu0 0
        %614 = vmatprep.subr.bf16.mxu0 0
        %615 = vmatpush1.bf16.msra.mxu0 0
        %616 = vmatprep.subr.bf16.mxu0 0
        %617 = vmatpush1.bf16.msra.mxu0 0
        %618 = vmatprep.subr.bf16.mxu0 0
        %619 = vmatpush1.bf16.msra.mxu0 0
        %620 = vmatprep.subr.bf16.mxu0 0
        %621 = vmatpush1.bf16.msra.mxu0 0
        %622 = vmatprep.subr.bf16.mxu0 0
        %623 = vmatpush1.bf16.msra.mxu0 0
        %624 = vmatprep.subr.bf16.mxu0 0
        %625 = vmatpush1.bf16.msra.mxu0 0
        %626 = vmatprep.mubr.bf16.mxu0 0
        %627 = vmatmul.mubr.bf16.gmra.mrb[0].mxu0 %v375
        %v628 = vpop.f32.mrb[0].mxu0
        %v629 = vadd.f32 %v421, %v628
        %v630 = vpop.f32.mrb[0].mxu0
        %v631 = vpop.f32.mrb[0].mxu0
        %v632 = vpop.f32.mrb[0].mxu0
        %633 = vdwg.mxu0
        %v634 = vxor.u32 %v588, 2147483648
        %v635 = vmul.f32 %v634, 1.442695
        %v636 = vpow.pop %v635
        %v637 = vadd.f32 %v636, 1.0
        %v638 = vrcp.pop %v637
        %v639 = vmul.f32 1.0, %v638
        %v640 = vtanh.pop %v590
        %v641 = vxor.u32 %v629, 2147483648
        %v642 = vmul.f32 %v641, 1.442695
        %v643 = vpow.pop %v642
        %v644 = vadd.f32 %v643, 1.0
        %v645 = vrcp.pop %v644
        %v646 = vmul.f32 1.0, %v645
        %v647 = vmul.f32 %v639, %v640
        %v648 = vtanh.pop %v647
        %v649 = vmul.f32 %v646, %v648
        %v650 = vpack.c.bf16 %v649, %v649
        %v651 = vld [vmem:[%s4] sm:$0xf]
        %v652 = vld [vmem:[%s4 + $0x4] sm:$0xf]
        %v653 = vld [vmem:[%s4 + $0x8] sm:$0xf]
        %v654 = vld [vmem:[%s4 + $0xc] sm:$0xf]
        %v655 = vld [vmem:[%s4 + $0x10] sm:$0xf]
        %v656 = vld [vmem:[%s4 + $0x14] sm:$0xf]
        %v657 = vld [vmem:[%s4 + $0x18] sm:$0xf]
        %v658 = vld [vmem:[%s4 + $0x1c] sm:$0xf]
        %v659 = vld [vmem:[%s4 + $0x20] sm:$0xf]
        %v660 = vld [vmem:[%s4 + $0x24] sm:$0xf]
        %v661 = vld [vmem:[%s4 + $0x28] sm:$0xf]
        %v662 = vld [vmem:[%s4 + $0x2c] sm:$0xf]
        %v663 = vld [vmem:[%s4 + $0x30] sm:$0xf]
        %v664 = vld [vmem:[%s4 + $0x34] sm:$0xf]
        %v665 = vld [vmem:[%s4 + $0x38] sm:$0xf]
        %v666 = vld [vmem:[%s4 + $0x3c] sm:$0xf]
        %v667 = vld [vmem:[%s5] sm:$0x1]
        %v669 = vlaneseq
        %v670 = vshrl.u32 %v669, 7
        %v671 = vsub.s32 0, %v670
        %v672 = vrot.slane %v667, %v671
        %v690 = vunpack.c.l.b16 %v651
        %v691 = vunpack.c.l.b16 %v652
        %v692 = vunpack.c.l.b16 %v653
        %v693 = vunpack.c.l.b16 %v654
        %v694 = vunpack.c.l.b16 %v655
        %v695 = vunpack.c.l.b16 %v656
        %v696 = vunpack.c.l.b16 %v657
        %v697 = vunpack.c.l.b16 %v658
        %v698 = vunpack.c.l.b16 %v659
        %v699 = vunpack.c.l.b16 %v660
        %v700 = vunpack.c.l.b16 %v661
        %v701 = vunpack.c.l.b16 %v662
        %v702 = vunpack.c.l.b16 %v663
        %v703 = vunpack.c.l.b16 %v664
        %v704 = vunpack.c.l.b16 %v665
        %v705 = vunpack.c.l.b16 %v666
        %v706 = vpack.c.b16 %v691, %v690
        %v707 = vpack.c.b16 %v693, %v692
        %v708 = vpack.c.b16 %v695, %v694
        %v709 = vpack.c.b16 %v697, %v696
        %v710 = vpack.c.b16 %v699, %v698
        %v711 = vpack.c.b16 %v701, %v700
        %v712 = vpack.c.b16 %v703, %v702
        %v713 = vpack.c.b16 %v705, %v704
        %722 = vmatprep.subr.bf16.mxu0 0
        %723 = vmatpush1.bf16.msra.mxu0 %v706
        %724 = vmatprep.subr.bf16.mxu0 0
        %725 = vmatpush1.bf16.msra.mxu0 %v707
        %726 = vmatprep.subr.bf16.mxu0 0
        %727 = vmatpush1.bf16.msra.mxu0 %v708
        %728 = vmatprep.subr.bf16.mxu0 0
        %729 = vmatpush1.bf16.msra.mxu0 %v709
        %730 = vmatprep.subr.bf16.mxu0 0
        %731 = vmatpush1.bf16.msra.mxu0 %v710
        %732 = vmatprep.subr.bf16.mxu0 0
        %733 = vmatpush1.bf16.msra.mxu0 %v711
        %734 = vmatprep.subr.bf16.mxu0 0
        %735 = vmatpush1.bf16.msra.mxu0 %v712
        %736 = vmatprep.subr.bf16.mxu0 0
        %737 = vmatpush1.bf16.msra.mxu0 %v713
        %738 = vmatprep.subr.bf16.mxu0 0
        %739 = vmatpush1.bf16.msra.mxu0 0
        %740 = vmatprep.subr.bf16.mxu0 0
        %741 = vmatpush1.bf16.msra.mxu0 0
        %742 = vmatprep.subr.bf16.mxu0 0
        %743 = vmatpush1.bf16.msra.mxu0 0
        %744 = vmatprep.subr.bf16.mxu0 0
        %745 = vmatpush1.bf16.msra.mxu0 0
        %746 = vmatprep.subr.bf16.mxu0 0
        %747 = vmatpush1.bf16.msra.mxu0 0
        %748 = vmatprep.subr.bf16.mxu0 0
        %749 = vmatpush1.bf16.msra.mxu0 0
        %750 = vmatprep.subr.bf16.mxu0 0
        %751 = vmatpush1.bf16.msra.mxu0 0
        %752 = vmatprep.subr.bf16.mxu0 0
        %753 = vmatpush1.bf16.msra.mxu0 0
        %754 = vmatprep.mubr.bf16.mxu0 0
        %755 = vmatmul.mubr.bf16.gmra.mrb[0].mxu0 %v650
        %v756 = vpop.f32.mrb[0].mxu0
        %v757 = vadd.f32 %v672, %v756
        %v758 = vpop.f32.mrb[0].mxu0
        %v759 = vpop.f32.mrb[0].mxu0
        %v760 = vpop.f32.mrb[0].mxu0
        %761 = vdwg.mxu0
        %762 = vst [vmem:[%s6] sm:$0xff] %v757
      $region52: #{temporal_gcn_forward.9} parent=43 // pred_fallthru
        _
      // Predicated region
      $region53: #{temporal_gcn_forward.9} parent=43 // pred_check
        %p763 = pneg %p166
      $region54: #{temporal_gcn_forward.9} parent=43 // pred_check_branch
        %765 = sbr.rel (%p763) target = $region56
      $region55: #{temporal_gcn_forward.9} parent=43 // pred_region
        _
      $region56: #{temporal_gcn_forward.9} parent=43 // pred_fallthru
        _
      // Predicated region
      $region57: #{temporal_gcn_forward.9} parent=43 // pred_check
        %p766 = pneg %p166
      $region58: #{temporal_gcn_forward.9} parent=43 // pred_check_branch
        %768 = sbr.rel (%p766) target = $region60
      $region59: #{temporal_gcn_forward.9} parent=43 // pred_region
        _
      $region60: #{temporal_gcn_forward.9} parent=43 // pred_fallthru
        _
    $region44: #{temporal_gcn_forward.9} parent=5 // pred_fallthru
      _
    %p769 = scmp.le.s32.totalorder 2, %s12
    // Predicated region
    $region61: #{temporal_gcn_forward.9} parent=5 // pred_check
      %p770 = pneg %p769
    $region62: #{temporal_gcn_forward.9} parent=5 // pred_check_branch
      %772 = sbr.rel (%p770) target = $region64
    $region63: #{temporal_gcn_forward.9} parent=5 // pred_region
      %s773 = ssub.s32 %s12, 2
    $region64: #{temporal_gcn_forward.9} parent=5 // pred_fallthru
      _
  $region6: #{temporal_gcn_forward.9} parent=0 // loop_footer
    %s16 = sadd.s32 1, %s12
  $region7: #{temporal_gcn_forward.9} parent=0 // loop_footer_branch
    %11 = sbr.rel target = $region3
  $region8: #{temporal_gcn_forward.9} parent=0 // loop_exit
    _

</llo_original>
